<compile_context>
chip_gen: v7x
topology: tpu7x:2x2x1
jax: 0.10.0
libtpu: 0.0.40
codegen_flags: <defaults>
</compile_context>

<pallas_src>
import jax
import jax.numpy as jnp
from jax.experimental import pallas as pl
from jax.experimental.pallas import tpu as pltpu


def _rnn_kernel(idx_ref, emb_ref, wih0_ref, wbig_ref, bbig_ref, hid_ref,
                tproj_ref, pre_ref):
    """Wavefront multi-layer Elman RNN forward (tanh), padded lane-dense layout.

    idx_ref   : (B, T)        int32 phoneme indices                     (SMEM)
    emb_ref   : (V, Hp)       embedding table, H zero-padded to Hp      (VMEM)
    wih0_ref  : (Hp, Hp)      layer-0 W_ih (x @ W convention)           (VMEM)
    wbig_ref  : (L*Hp, L*Hp)  block matrix: block (l,l) = W_hh_l,
                              block (l,l+1) = W_ih_{l+1}, else zero     (VMEM)
    bbig_ref  : (1, L*Hp)     per-layer combined bias b_ih_l + b_hh_l   (VMEM)
    hid_ref   : (L, Bp, Hp)   OUT: final hidden state of every layer    (VMEM)
    tproj_ref : (V, 1, Hp)    scratch: vocab rows projected by layer-0 W_ih
    pre_ref   : (T, Bp, Hp)   scratch: layer-0 pre-activations per timestep
    """
    B, T = idx_ref.shape
    L, Bp, Hp = hid_ref.shape
    V = emb_ref.shape[0]

    # ---- In-kernel embedding gather, folded through layer-0's input projection.
    # Project the whole vocab once (O(V) rows, independent of T*B), then gather
    # projected rows into the per-timestep pre-activation scratch.
    proj = jnp.dot(emb_ref[...], wih0_ref[...],
                   preferred_element_type=jnp.float32)            # (V, Hp)
    for v in range(V):                                            # static unroll
        tproj_ref[v] = proj[v:v + 1, :]                           # (1, Hp) rows

    # Zero-init: padded batch rows must hold finite, deterministic values (they
    # are NOT kept at zero by the recurrence -- see header note -- but they must
    # not start as scratch garbage).
    pre_ref[...] = jnp.zeros_like(pre_ref)
    for t in range(T):
        for b in range(B):
            v = idx_ref[b, t]                                     # scalar from SMEM
            pre_ref[t, b:b + 1, :] = tproj_ref[v]                 # dynamic row gather

    # ---- Layer wavefront: at step s, layer l advances time t = s - l.
    # All L layers' input + recurrent matmuls for one wavefront step are a single
    # (Bp, L*Hp) x (L*Hp, L*Hp) block matmul; the dependent chain is T + L - 1.
    h = [jnp.zeros((Bp, Hp), dtype=jnp.float32) for _ in range(L)]
    for s in range(T + L - 1):                                    # static unroll
        big = h[0] if L == 1 else jnp.concatenate(h, axis=1)      # (Bp, L*Hp)
        z = jnp.dot(big, wbig_ref[...],
                    preferred_element_type=jnp.float32) + bbig_ref[...]
        new_h = list(h)
        for l in range(L):
            t = s - l
            if 0 <= t < T:                                        # compile-time guard
                zl = z[:, l * Hp:(l + 1) * Hp]
                if l == 0:
                    zl = zl + pre_ref[t]                          # layer-0 input proj
                new_h[l] = jnp.tanh(zl)
            # inactive layers keep their previous hidden state
        h = new_h

    for l in range(L):
        hid_ref[l] = h[l]


def encoder_rnn_forward(inp, embedding, w_ih, w_hh, b_ih, b_hh):
    """PhonemeEncoder.forward (chained_forward path, eval mode).

    inp       : (B, T) int32 phoneme indices
    embedding : (vocab, H) float32
    w_ih/w_hh : (L, H, H) float32, pre-transposed vs. PyTorch (x @ W convention)
    b_ih/b_hh : (L, H) float32
    returns   : (L, B, H) float32 final hidden state per layer (PyTorch `hidden`)
    """
    B, T = inp.shape
    L, H, _ = w_ih.shape
    V = embedding.shape[0]

    # Lane/sublane-dense padding targets.
    Hp = max(128, ((H + 127) // 128) * 128)
    Bp = max(8, ((B + 7) // 8) * 8)

    # TODO(synk): training-mode dropout (nn.Dropout) not implemented; eval is identity.
    # TODO(synk): for large B on v7x (2 TCs), add a leading "parallel" batch-tile
    #             grid axis; for large T, tile time into grid chunks carrying h.

    emb_p = jnp.pad(embedding.astype(jnp.float32), ((0, 0), (0, Hp - H)))
    wih0_p = jnp.pad(w_ih[0], ((0, Hp - H), (0, Hp - H)))

    w_ih_p = jnp.pad(w_ih, ((0, 0), (0, Hp - H), (0, Hp - H)))
    w_hh_p = jnp.pad(w_hh, ((0, 0), (0, Hp - H), (0, Hp - H)))

    # Block weight matrix used at every wavefront step:
    #   block (l, l)   = W_hh_l     (recurrent path)
    #   block (l, l+1) = W_ih_{l+1} (layer l's output feeds layer l+1's input)
    w_big = jnp.zeros((L * Hp, L * Hp), jnp.float32)
    for l in range(L):
        w_big = w_big.at[l * Hp:(l + 1) * Hp, l * Hp:(l + 1) * Hp].set(w_hh_p[l])
        if l + 1 < L:
            w_big = w_big.at[l * Hp:(l + 1) * Hp,
                             (l + 1) * Hp:(l + 2) * Hp].set(w_ih_p[l + 1])

    # Combined bias per layer; zero in padded lanes.
    b_big = jnp.pad(b_ih + b_hh, ((0, 0), (0, Hp - H))).reshape(1, L * Hp)

    idx = inp.astype(jnp.int32)

    out = pl.pallas_call(
        _rnn_kernel,
        out_shape=jax.ShapeDtypeStruct((L, Bp, Hp), jnp.float32),
        # No grid: single invocation, whole-array operands, no double-buffering.
        in_specs=[
            pl.BlockSpec(memory_space=pltpu.MemorySpace.SMEM),   # indices
            pl.BlockSpec(memory_space=pltpu.MemorySpace.VMEM),   # embedding table
            pl.BlockSpec(memory_space=pltpu.MemorySpace.VMEM),   # layer-0 W_ih
            pl.BlockSpec(memory_space=pltpu.MemorySpace.VMEM),   # block W (wavefront)
            pl.BlockSpec(memory_space=pltpu.MemorySpace.VMEM),   # combined bias
        ],
        out_specs=pl.BlockSpec(memory_space=pltpu.MemorySpace.VMEM),
        scratch_shapes=[
            pltpu.VMEM((V, 1, Hp), jnp.float32),    # projected vocab table
            pltpu.VMEM((T, Bp, Hp), jnp.float32),   # layer-0 pre-activations
        ],
    )(idx, emb_p, wih0_p, w_big, b_big)

    # Strip padding back to the module's logical shape.
    return out[:, :B, :H]


def _reference_forward(inp, embedding, w_ih, w_hh, b_ih, b_hh):
    """Pure-JAX reference mirroring torch.nn.RNN (tanh, batch_first) semantics."""
    B, T = inp.shape
    L, H, _ = w_ih.shape
    x = jnp.take(embedding, inp, axis=0)  # (B, T, H)
    hiddens = []
    layer_in = x
    for l in range(L):
        h = jnp.zeros((B, H), jnp.float32)
        outs = []
        for t in range(T):
            h = jnp.tanh(layer_in[:, t, :] @ w_ih[l] + h @ w_hh[l] + b_ih[l] + b_hh[l])
            outs.append(h)
        layer_in = jnp.stack(outs, axis=1)
        hiddens.append(h)
    return jnp.stack(hiddens, axis=0)


if __name__ == "__main__":
    # Small, module-consistent shapes.
    vocab_size = 16
    hidden_size = 32
    num_layers = 2
    batch = 2
    seq_len = 8

    key = jax.random.PRNGKey(0)
    k_emb, k_wih, k_whh, k_bih, k_bhh, k_inp = jax.random.split(key, 6)

    # Deterministic parameter init (PyTorch-style ranges).
    embedding = jax.random.normal(k_emb, (vocab_size, hidden_size), jnp.float32)
    bound = 1.0 / jnp.sqrt(hidden_size)
    w_ih = jax.random.uniform(k_wih, (num_layers, hidden_size, hidden_size),
                              jnp.float32, -bound, bound)
    w_hh = jax.random.uniform(k_whh, (num_layers, hidden_size, hidden_size),
                              jnp.float32, -bound, bound)
    b_ih = jax.random.uniform(k_bih, (num_layers, hidden_size), jnp.float32, -bound, bound)
    b_hh = jax.random.uniform(k_bhh, (num_layers, hidden_size), jnp.float32, -bound, bound)

    inp = jax.random.randint(k_inp, (batch, seq_len), 0, vocab_size, jnp.int32)

    hidden = encoder_rnn_forward(inp, embedding, w_ih, w_hh, b_ih, b_hh)
    hidden = jax.block_until_ready(hidden)

    ref = _reference_forward(inp, embedding, w_ih, w_hh, b_ih, b_hh)
    assert hidden.shape == (num_layers, batch, hidden_size)
    assert jnp.allclose(hidden, ref, rtol=1e-5, atol=1e-5)

    print("KERNEL_OK")
</pallas_src>

<mosaic_0001>
module attributes {stable_mosaic.version = 11 : i64} {
  func.func @_rnn_kernel(%arg0: memref<2x8xi32, #tpu.memory_space<smem>>, %arg1: memref<16x128xf32, #tpu.memory_space<vmem>>, %arg2: memref<128x128xf32, #tpu.memory_space<vmem>>, %arg3: memref<256x256xf32, #tpu.memory_space<vmem>>, %arg4: memref<1x256xf32, #tpu.memory_space<vmem>>, %arg5: memref<2x8x128xf32, #tpu.memory_space<vmem>>, %arg6: memref<16x1x128xf32, #tpu.memory_space<vmem>>, %arg7: memref<8x8x128xf32, #tpu.memory_space<vmem>>) attributes {dimension_semantics = [], scalar_prefetch = 0 : i64, scratch_operands = 2 : i64, tpu.core_type = #tpu.core_type<tc>} {
    %c0 = arith.constant 0 : index
    %c0_0 = arith.constant 0 : index
    %0 = vector.load %arg1[%c0, %c0_0] : memref<16x128xf32, #tpu.memory_space<vmem>>, vector<16x128xf32>
    %c0_1 = arith.constant 0 : index
    %c0_2 = arith.constant 0 : index
    %1 = vector.load %arg2[%c0_1, %c0_2] : memref<128x128xf32, #tpu.memory_space<vmem>>, vector<128x128xf32>
    %cst = arith.constant dense<0.000000e+00> : vector<16x128xf32>
    %2 = tpu.matmul %0, %1, %cst {dimension_numbers = #tpu.dot_dimension_numbers<[1], [0], [0], [1], [0, 0, 1, 1], [], []>} : vector<16x128xf32>, vector<128x128xf32>, vector<16x128xf32> -> vector<16x128xf32>
    %3 = vector.extract_strided_slice %2 {offsets = [0, 0], sizes = [1, 128], strides = [1, 1]} : vector<16x128xf32> to vector<1x128xf32>
    %c0_3 = arith.constant 0 : index
    %c0_4 = arith.constant 0 : index
    %c0_5 = arith.constant 0 : index
    %4 = vector.load %arg6[%c0_3, %c0_4, %c0_5] : memref<16x1x128xf32, #tpu.memory_space<vmem>>, vector<1x1x128xf32>
    %5 = vector.shape_cast %4 : vector<1x1x128xf32> to vector<1x128xf32>
    %6 = vector.shape_cast %3 : vector<1x128xf32> to vector<1x1x128xf32>
    tpu.vector_store %arg6[%c0_3, %c0_4, %c0_5], %6 {strides = array<i32>} : memref<16x1x128xf32, #tpu.memory_space<vmem>>, vector<1x1x128xf32>,
    %7 = vector.extract_strided_slice %2 {offsets = [1, 0], sizes = [1, 128], strides = [1, 1]} : vector<16x128xf32> to vector<1x128xf32>
    %c1 = arith.constant 1 : index
    %c0_6 = arith.constant 0 : index
    %c0_7 = arith.constant 0 : index
    %8 = vector.load %arg6[%c1, %c0_6, %c0_7] : memref<16x1x128xf32, #tpu.memory_space<vmem>>, vector<1x1x128xf32>
    %9 = vector.shape_cast %8 : vector<1x1x128xf32> to vector<1x128xf32>
    %10 = vector.shape_cast %7 : vector<1x128xf32> to vector<1x1x128xf32>
    tpu.vector_store %arg6[%c1, %c0_6, %c0_7], %10 {strides = array<i32>} : memref<16x1x128xf32, #tpu.memory_space<vmem>>, vector<1x1x128xf32>,
    %11 = vector.extract_strided_slice %2 {offsets = [2, 0], sizes = [1, 128], strides = [1, 1]} : vector<16x128xf32> to vector<1x128xf32>
    %c2 = arith.constant 2 : index
    %c0_8 = arith.constant 0 : index
    %c0_9 = arith.constant 0 : index
    %12 = vector.load %arg6[%c2, %c0_8, %c0_9] : memref<16x1x128xf32, #tpu.memory_space<vmem>>, vector<1x1x128xf32>
    %13 = vector.shape_cast %12 : vector<1x1x128xf32> to vector<1x128xf32>
    %14 = vector.shape_cast %11 : vector<1x128xf32> to vector<1x1x128xf32>
    tpu.vector_store %arg6[%c2, %c0_8, %c0_9], %14 {strides = array<i32>} : memref<16x1x128xf32, #tpu.memory_space<vmem>>, vector<1x1x128xf32>,
    %15 = vector.extract_strided_slice %2 {offsets = [3, 0], sizes = [1, 128], strides = [1, 1]} : vector<16x128xf32> to vector<1x128xf32>
    %c3 = arith.constant 3 : index
    %c0_10 = arith.constant 0 : index
    %c0_11 = arith.constant 0 : index
    %16 = vector.load %arg6[%c3, %c0_10, %c0_11] : memref<16x1x128xf32, #tpu.memory_space<vmem>>, vector<1x1x128xf32>
    %17 = vector.shape_cast %16 : vector<1x1x128xf32> to vector<1x128xf32>
    %18 = vector.shape_cast %15 : vector<1x128xf32> to vector<1x1x128xf32>
    tpu.vector_store %arg6[%c3, %c0_10, %c0_11], %18 {strides = array<i32>} : memref<16x1x128xf32, #tpu.memory_space<vmem>>, vector<1x1x128xf32>,
    %19 = vector.extract_strided_slice %2 {offsets = [4, 0], sizes = [1, 128], strides = [1, 1]} : vector<16x128xf32> to vector<1x128xf32>
    %c4 = arith.constant 4 : index
    %c0_12 = arith.constant 0 : index
    %c0_13 = arith.constant 0 : index
    %20 = vector.load %arg6[%c4, %c0_12, %c0_13] : memref<16x1x128xf32, #tpu.memory_space<vmem>>, vector<1x1x128xf32>
    %21 = vector.shape_cast %20 : vector<1x1x128xf32> to vector<1x128xf32>
    %22 = vector.shape_cast %19 : vector<1x128xf32> to vector<1x1x128xf32>
    tpu.vector_store %arg6[%c4, %c0_12, %c0_13], %22 {strides = array<i32>} : memref<16x1x128xf32, #tpu.memory_space<vmem>>, vector<1x1x128xf32>,
    %23 = vector.extract_strided_slice %2 {offsets = [5, 0], sizes = [1, 128], strides = [1, 1]} : vector<16x128xf32> to vector<1x128xf32>
    %c5 = arith.constant 5 : index
    %c0_14 = arith.constant 0 : index
    %c0_15 = arith.constant 0 : index
    %24 = vector.load %arg6[%c5, %c0_14, %c0_15] : memref<16x1x128xf32, #tpu.memory_space<vmem>>, vector<1x1x128xf32>
    %25 = vector.shape_cast %24 : vector<1x1x128xf32> to vector<1x128xf32>
    %26 = vector.shape_cast %23 : vector<1x128xf32> to vector<1x1x128xf32>
    tpu.vector_store %arg6[%c5, %c0_14, %c0_15], %26 {strides = array<i32>} : memref<16x1x128xf32, #tpu.memory_space<vmem>>, vector<1x1x128xf32>,
    %27 = vector.extract_strided_slice %2 {offsets = [6, 0], sizes = [1, 128], strides = [1, 1]} : vector<16x128xf32> to vector<1x128xf32>
    %c6 = arith.constant 6 : index
    %c0_16 = arith.constant 0 : index
    %c0_17 = arith.constant 0 : index
    %28 = vector.load %arg6[%c6, %c0_16, %c0_17] : memref<16x1x128xf32, #tpu.memory_space<vmem>>, vector<1x1x128xf32>
    %29 = vector.shape_cast %28 : vector<1x1x128xf32> to vector<1x128xf32>
    %30 = vector.shape_cast %27 : vector<1x128xf32> to vector<1x1x128xf32>
    tpu.vector_store %arg6[%c6, %c0_16, %c0_17], %30 {strides = array<i32>} : memref<16x1x128xf32, #tpu.memory_space<vmem>>, vector<1x1x128xf32>,
    %31 = vector.extract_strided_slice %2 {offsets = [7, 0], sizes = [1, 128], strides = [1, 1]} : vector<16x128xf32> to vector<1x128xf32>
    %c7 = arith.constant 7 : index
    %c0_18 = arith.constant 0 : index
    %c0_19 = arith.constant 0 : index
    %32 = vector.load %arg6[%c7, %c0_18, %c0_19] : memref<16x1x128xf32, #tpu.memory_space<vmem>>, vector<1x1x128xf32>
    %33 = vector.shape_cast %32 : vector<1x1x128xf32> to vector<1x128xf32>
    %34 = vector.shape_cast %31 : vector<1x128xf32> to vector<1x1x128xf32>
    tpu.vector_store %arg6[%c7, %c0_18, %c0_19], %34 {strides = array<i32>} : memref<16x1x128xf32, #tpu.memory_space<vmem>>, vector<1x1x128xf32>,
    %35 = vector.extract_strided_slice %2 {offsets = [8, 0], sizes = [1, 128], strides = [1, 1]} : vector<16x128xf32> to vector<1x128xf32>
    %c8 = arith.constant 8 : index
    %c0_20 = arith.constant 0 : index
    %c0_21 = arith.constant 0 : index
    %36 = vector.load %arg6[%c8, %c0_20, %c0_21] : memref<16x1x128xf32, #tpu.memory_space<vmem>>, vector<1x1x128xf32>
    %37 = vector.shape_cast %36 : vector<1x1x128xf32> to vector<1x128xf32>
    %38 = vector.shape_cast %35 : vector<1x128xf32> to vector<1x1x128xf32>
    tpu.vector_store %arg6[%c8, %c0_20, %c0_21], %38 {strides = array<i32>} : memref<16x1x128xf32, #tpu.memory_space<vmem>>, vector<1x1x128xf32>,
    %39 = vector.extract_strided_slice %2 {offsets = [9, 0], sizes = [1, 128], strides = [1, 1]} : vector<16x128xf32> to vector<1x128xf32>
    %c9 = arith.constant 9 : index
    %c0_22 = arith.constant 0 : index
    %c0_23 = arith.constant 0 : index
    %40 = vector.load %arg6[%c9, %c0_22, %c0_23] : memref<16x1x128xf32, #tpu.memory_space<vmem>>, vector<1x1x128xf32>
    %41 = vector.shape_cast %40 : vector<1x1x128xf32> to vector<1x128xf32>
    %42 = vector.shape_cast %39 : vector<1x128xf32> to vector<1x1x128xf32>
    tpu.vector_store %arg6[%c9, %c0_22, %c0_23], %42 {strides = array<i32>} : memref<16x1x128xf32, #tpu.memory_space<vmem>>, vector<1x1x128xf32>,
    %43 = vector.extract_strided_slice %2 {offsets = [10, 0], sizes = [1, 128], strides = [1, 1]} : vector<16x128xf32> to vector<1x128xf32>
    %c10 = arith.constant 10 : index
    %c0_24 = arith.constant 0 : index
    %c0_25 = arith.constant 0 : index
    %44 = vector.load %arg6[%c10, %c0_24, %c0_25] : memref<16x1x128xf32, #tpu.memory_space<vmem>>, vector<1x1x128xf32>
    %45 = vector.shape_cast %44 : vector<1x1x128xf32> to vector<1x128xf32>
    %46 = vector.shape_cast %43 : vector<1x128xf32> to vector<1x1x128xf32>
    tpu.vector_store %arg6[%c10, %c0_24, %c0_25], %46 {strides = array<i32>} : memref<16x1x128xf32, #tpu.memory_space<vmem>>, vector<1x1x128xf32>,
    %47 = vector.extract_strided_slice %2 {offsets = [11, 0], sizes = [1, 128], strides = [1, 1]} : vector<16x128xf32> to vector<1x128xf32>
    %c11 = arith.constant 11 : index
    %c0_26 = arith.constant 0 : index
    %c0_27 = arith.constant 0 : index
    %48 = vector.load %arg6[%c11, %c0_26, %c0_27] : memref<16x1x128xf32, #tpu.memory_space<vmem>>, vector<1x1x128xf32>
    %49 = vector.shape_cast %48 : vector<1x1x128xf32> to vector<1x128xf32>
    %50 = vector.shape_cast %47 : vector<1x128xf32> to vector<1x1x128xf32>
    tpu.vector_store %arg6[%c11, %c0_26, %c0_27], %50 {strides = array<i32>} : memref<16x1x128xf32, #tpu.memory_space<vmem>>, vector<1x1x128xf32>,
    %51 = vector.extract_strided_slice %2 {offsets = [12, 0], sizes = [1, 128], strides = [1, 1]} : vector<16x128xf32> to vector<1x128xf32>
    %c12 = arith.constant 12 : index
    %c0_28 = arith.constant 0 : index
    %c0_29 = arith.constant 0 : index
    %52 = vector.load %arg6[%c12, %c0_28, %c0_29] : memref<16x1x128xf32, #tpu.memory_space<vmem>>, vector<1x1x128xf32>
    %53 = vector.shape_cast %52 : vector<1x1x128xf32> to vector<1x128xf32>
    %54 = vector.shape_cast %51 : vector<1x128xf32> to vector<1x1x128xf32>
    tpu.vector_store %arg6[%c12, %c0_28, %c0_29], %54 {strides = array<i32>} : memref<16x1x128xf32, #tpu.memory_space<vmem>>, vector<1x1x128xf32>,
    %55 = vector.extract_strided_slice %2 {offsets = [13, 0], sizes = [1, 128], strides = [1, 1]} : vector<16x128xf32> to vector<1x128xf32>
    %c13 = arith.constant 13 : index
    %c0_30 = arith.constant 0 : index
    %c0_31 = arith.constant 0 : index
    %56 = vector.load %arg6[%c13, %c0_30, %c0_31] : memref<16x1x128xf32, #tpu.memory_space<vmem>>, vector<1x1x128xf32>
    %57 = vector.shape_cast %56 : vector<1x1x128xf32> to vector<1x128xf32>
    %58 = vector.shape_cast %55 : vector<1x128xf32> to vector<1x1x128xf32>
    tpu.vector_store %arg6[%c13, %c0_30, %c0_31], %58 {strides = array<i32>} : memref<16x1x128xf32, #tpu.memory_space<vmem>>, vector<1x1x128xf32>,
    %59 = vector.extract_strided_slice %2 {offsets = [14, 0], sizes = [1, 128], strides = [1, 1]} : vector<16x128xf32> to vector<1x128xf32>
    %c14 = arith.constant 14 : index
    %c0_32 = arith.constant 0 : index
    %c0_33 = arith.constant 0 : index
    %60 = vector.load %arg6[%c14, %c0_32, %c0_33] : memref<16x1x128xf32, #tpu.memory_space<vmem>>, vector<1x1x128xf32>
    %61 = vector.shape_cast %60 : vector<1x1x128xf32> to vector<1x128xf32>
    %62 = vector.shape_cast %59 : vector<1x128xf32> to vector<1x1x128xf32>
    tpu.vector_store %arg6[%c14, %c0_32, %c0_33], %62 {strides = array<i32>} : memref<16x1x128xf32, #tpu.memory_space<vmem>>, vector<1x1x128xf32>,
    %63 = vector.extract_strided_slice %2 {offsets = [15, 0], sizes = [1, 128], strides = [1, 1]} : vector<16x128xf32> to vector<1x128xf32>
    %c15 = arith.constant 15 : index
    %c0_34 = arith.constant 0 : index
    %c0_35 = arith.constant 0 : index
    %64 = vector.load %arg6[%c15, %c0_34, %c0_35] : memref<16x1x128xf32, #tpu.memory_space<vmem>>, vector<1x1x128xf32>
    %65 = vector.shape_cast %64 : vector<1x1x128xf32> to vector<1x128xf32>
    %66 = vector.shape_cast %63 : vector<1x128xf32> to vector<1x1x128xf32>
    tpu.vector_store %arg6[%c15, %c0_34, %c0_35], %66 {strides = array<i32>} : memref<16x1x128xf32, #tpu.memory_space<vmem>>, vector<1x1x128xf32>,
    %cst_36 = arith.constant 0.000000e+00 : f32
    %67 = vector.broadcast %cst_36 : f32 to vector<8x8x128xf32>
    %c0_37 = arith.constant 0 : index
    %c0_38 = arith.constant 0 : index
    %c0_39 = arith.constant 0 : index
    %68 = vector.load %arg7[%c0_37, %c0_38, %c0_39] : memref<8x8x128xf32, #tpu.memory_space<vmem>>, vector<8x8x128xf32>
    tpu.vector_store %arg7[%c0_37, %c0_38, %c0_39], %67 {strides = array<i32>} : memref<8x8x128xf32, #tpu.memory_space<vmem>>, vector<8x8x128xf32>,
    %c0_40 = arith.constant 0 : index
    %c0_41 = arith.constant 0 : index
    %69 = memref.load %arg0[%c0_40, %c0_41] : memref<2x8xi32, #tpu.memory_space<smem>>
    %70 = arith.index_cast %69 : i32 to index
    %c0_42 = arith.constant 0 : index
    %c0_43 = arith.constant 0 : index
    %71 = vector.load %arg6[%70, %c0_42, %c0_43] : memref<16x1x128xf32, #tpu.memory_space<vmem>>, vector<1x1x128xf32>
    %72 = vector.shape_cast %71 : vector<1x1x128xf32> to vector<1x128xf32>
    %c0_44 = arith.constant 0 : index
    %c0_45 = arith.constant 0 : index
    %c0_46 = arith.constant 0 : index
    %73 = vector.load %arg7[%c0_44, %c0_45, %c0_46] : memref<8x8x128xf32, #tpu.memory_space<vmem>>, vector<1x1x128xf32>
    %74 = vector.shape_cast %73 : vector<1x1x128xf32> to vector<1x128xf32>
    %75 = vector.shape_cast %72 : vector<1x128xf32> to vector<1x1x128xf32>
    tpu.vector_store %arg7[%c0_44, %c0_45, %c0_46], %75 {strides = array<i32>} : memref<8x8x128xf32, #tpu.memory_space<vmem>>, vector<1x1x128xf32>,
    %c1_47 = arith.constant 1 : index
    %c0_48 = arith.constant 0 : index
    %76 = memref.load %arg0[%c1_47, %c0_48] : memref<2x8xi32, #tpu.memory_space<smem>>
    %77 = arith.index_cast %76 : i32 to index
    %c0_49 = arith.constant 0 : index
    %c0_50 = arith.constant 0 : index
    %78 = vector.load %arg6[%77, %c0_49, %c0_50] : memref<16x1x128xf32, #tpu.memory_space<vmem>>, vector<1x1x128xf32>
    %79 = vector.shape_cast %78 : vector<1x1x128xf32> to vector<1x128xf32>
    %c0_51 = arith.constant 0 : index
    %c1_52 = arith.constant 1 : index
    %c0_53 = arith.constant 0 : index
    %80 = vector.load %arg7[%c0_51, %c1_52, %c0_53] : memref<8x8x128xf32, #tpu.memory_space<vmem>>, vector<1x1x128xf32>
    %81 = vector.shape_cast %80 : vector<1x1x128xf32> to vector<1x128xf32>
    %82 = vector.shape_cast %79 : vector<1x128xf32> to vector<1x1x128xf32>
    tpu.vector_store %arg7[%c0_51, %c1_52, %c0_53], %82 {strides = array<i32>} : memref<8x8x128xf32, #tpu.memory_space<vmem>>, vector<1x1x128xf32>,
    %c0_54 = arith.constant 0 : index
    %c1_55 = arith.constant 1 : index
    %83 = memref.load %arg0[%c0_54, %c1_55] : memref<2x8xi32, #tpu.memory_space<smem>>
    %84 = arith.index_cast %83 : i32 to index
    %c0_56 = arith.constant 0 : index
    %c0_57 = arith.constant 0 : index
    %85 = vector.load %arg6[%84, %c0_56, %c0_57] : memref<16x1x128xf32, #tpu.memory_space<vmem>>, vector<1x1x128xf32>
    %86 = vector.shape_cast %85 : vector<1x1x128xf32> to vector<1x128xf32>
    %c1_58 = arith.constant 1 : index
    %c0_59 = arith.constant 0 : index
    %c0_60 = arith.constant 0 : index
    %87 = vector.load %arg7[%c1_58, %c0_59, %c0_60] : memref<8x8x128xf32, #tpu.memory_space<vmem>>, vector<1x1x128xf32>
    %88 = vector.shape_cast %87 : vector<1x1x128xf32> to vector<1x128xf32>
    %89 = vector.shape_cast %86 : vector<1x128xf32> to vector<1x1x128xf32>
    tpu.vector_store %arg7[%c1_58, %c0_59, %c0_60], %89 {strides = array<i32>} : memref<8x8x128xf32, #tpu.memory_space<vmem>>, vector<1x1x128xf32>,
    %c1_61 = arith.constant 1 : index
    %c1_62 = arith.constant 1 : index
    %90 = memref.load %arg0[%c1_61, %c1_62] : memref<2x8xi32, #tpu.memory_space<smem>>
    %91 = arith.index_cast %90 : i32 to index
    %c0_63 = arith.constant 0 : index
    %c0_64 = arith.constant 0 : index
    %92 = vector.load %arg6[%91, %c0_63, %c0_64] : memref<16x1x128xf32, #tpu.memory_space<vmem>>, vector<1x1x128xf32>
    %93 = vector.shape_cast %92 : vector<1x1x128xf32> to vector<1x128xf32>
    %c1_65 = arith.constant 1 : index
    %c1_66 = arith.constant 1 : index
    %c0_67 = arith.constant 0 : index
    %94 = vector.load %arg7[%c1_65, %c1_66, %c0_67] : memref<8x8x128xf32, #tpu.memory_space<vmem>>, vector<1x1x128xf32>
    %95 = vector.shape_cast %94 : vector<1x1x128xf32> to vector<1x128xf32>
    %96 = vector.shape_cast %93 : vector<1x128xf32> to vector<1x1x128xf32>
    tpu.vector_store %arg7[%c1_65, %c1_66, %c0_67], %96 {strides = array<i32>} : memref<8x8x128xf32, #tpu.memory_space<vmem>>, vector<1x1x128xf32>,
    %c0_68 = arith.constant 0 : index
    %c2_69 = arith.constant 2 : index
    %97 = memref.load %arg0[%c0_68, %c2_69] : memref<2x8xi32, #tpu.memory_space<smem>>
    %98 = arith.index_cast %97 : i32 to index
    %c0_70 = arith.constant 0 : index
    %c0_71 = arith.constant 0 : index
    %99 = vector.load %arg6[%98, %c0_70, %c0_71] : memref<16x1x128xf32, #tpu.memory_space<vmem>>, vector<1x1x128xf32>
    %100 = vector.shape_cast %99 : vector<1x1x128xf32> to vector<1x128xf32>
    %c2_72 = arith.constant 2 : index
    %c0_73 = arith.constant 0 : index
    %c0_74 = arith.constant 0 : index
    %101 = vector.load %arg7[%c2_72, %c0_73, %c0_74] : memref<8x8x128xf32, #tpu.memory_space<vmem>>, vector<1x1x128xf32>
    %102 = vector.shape_cast %101 : vector<1x1x128xf32> to vector<1x128xf32>
    %103 = vector.shape_cast %100 : vector<1x128xf32> to vector<1x1x128xf32>
    tpu.vector_store %arg7[%c2_72, %c0_73, %c0_74], %103 {strides = array<i32>} : memref<8x8x128xf32, #tpu.memory_space<vmem>>, vector<1x1x128xf32>,
    %c1_75 = arith.constant 1 : index
    %c2_76 = arith.constant 2 : index
    %104 = memref.load %arg0[%c1_75, %c2_76] : memref<2x8xi32, #tpu.memory_space<smem>>
    %105 = arith.index_cast %104 : i32 to index
    %c0_77 = arith.constant 0 : index
    %c0_78 = arith.constant 0 : index
    %106 = vector.load %arg6[%105, %c0_77, %c0_78] : memref<16x1x128xf32, #tpu.memory_space<vmem>>, vector<1x1x128xf32>
    %107 = vector.shape_cast %106 : vector<1x1x128xf32> to vector<1x128xf32>
    %c2_79 = arith.constant 2 : index
    %c1_80 = arith.constant 1 : index
    %c0_81 = arith.constant 0 : index
    %108 = vector.load %arg7[%c2_79, %c1_80, %c0_81] : memref<8x8x128xf32, #tpu.memory_space<vmem>>, vector<1x1x128xf32>
    %109 = vector.shape_cast %108 : vector<1x1x128xf32> to vector<1x128xf32>
    %110 = vector.shape_cast %107 : vector<1x128xf32> to vector<1x1x128xf32>
    tpu.vector_store %arg7[%c2_79, %c1_80, %c0_81], %110 {strides = array<i32>} : memref<8x8x128xf32, #tpu.memory_space<vmem>>, vector<1x1x128xf32>,
    %c0_82 = arith.constant 0 : index
    %c3_83 = arith.constant 3 : index
    %111 = memref.load %arg0[%c0_82, %c3_83] : memref<2x8xi32, #tpu.memory_space<smem>>
    %112 = arith.index_cast %111 : i32 to index
    %c0_84 = arith.constant 0 : index
    %c0_85 = arith.constant 0 : index
    %113 = vector.load %arg6[%112, %c0_84, %c0_85] : memref<16x1x128xf32, #tpu.memory_space<vmem>>, vector<1x1x128xf32>
    %114 = vector.shape_cast %113 : vector<1x1x128xf32> to vector<1x128xf32>
    %c3_86 = arith.constant 3 : index
    %c0_87 = arith.constant 0 : index
    %c0_88 = arith.constant 0 : index
    %115 = vector.load %arg7[%c3_86, %c0_87, %c0_88] : memref<8x8x128xf32, #tpu.memory_space<vmem>>, vector<1x1x128xf32>
    %116 = vector.shape_cast %115 : vector<1x1x128xf32> to vector<1x128xf32>
    %117 = vector.shape_cast %114 : vector<1x128xf32> to vector<1x1x128xf32>
    tpu.vector_store %arg7[%c3_86, %c0_87, %c0_88], %117 {strides = array<i32>} : memref<8x8x128xf32, #tpu.memory_space<vmem>>, vector<1x1x128xf32>,
    %c1_89 = arith.constant 1 : index
    %c3_90 = arith.constant 3 : index
    %118 = memref.load %arg0[%c1_89, %c3_90] : memref<2x8xi32, #tpu.memory_space<smem>>
    %119 = arith.index_cast %118 : i32 to index
    %c0_91 = arith.constant 0 : index
    %c0_92 = arith.constant 0 : index
    %120 = vector.load %arg6[%119, %c0_91, %c0_92] : memref<16x1x128xf32, #tpu.memory_space<vmem>>, vector<1x1x128xf32>
    %121 = vector.shape_cast %120 : vector<1x1x128xf32> to vector<1x128xf32>
    %c3_93 = arith.constant 3 : index
    %c1_94 = arith.constant 1 : index
    %c0_95 = arith.constant 0 : index
    %122 = vector.load %arg7[%c3_93, %c1_94, %c0_95] : memref<8x8x128xf32, #tpu.memory_space<vmem>>, vector<1x1x128xf32>
    %123 = vector.shape_cast %122 : vector<1x1x128xf32> to vector<1x128xf32>
    %124 = vector.shape_cast %121 : vector<1x128xf32> to vector<1x1x128xf32>
    tpu.vector_store %arg7[%c3_93, %c1_94, %c0_95], %124 {strides = array<i32>} : memref<8x8x128xf32, #tpu.memory_space<vmem>>, vector<1x1x128xf32>,
    %c0_96 = arith.constant 0 : index
    %c4_97 = arith.constant 4 : index
    %125 = memref.load %arg0[%c0_96, %c4_97] : memref<2x8xi32, #tpu.memory_space<smem>>
    %126 = arith.index_cast %125 : i32 to index
    %c0_98 = arith.constant 0 : index
    %c0_99 = arith.constant 0 : index
    %127 = vector.load %arg6[%126, %c0_98, %c0_99] : memref<16x1x128xf32, #tpu.memory_space<vmem>>, vector<1x1x128xf32>
    %128 = vector.shape_cast %127 : vector<1x1x128xf32> to vector<1x128xf32>
    %c4_100 = arith.constant 4 : index
    %c0_101 = arith.constant 0 : index
    %c0_102 = arith.constant 0 : index
    %129 = vector.load %arg7[%c4_100, %c0_101, %c0_102] : memref<8x8x128xf32, #tpu.memory_space<vmem>>, vector<1x1x128xf32>
    %130 = vector.shape_cast %129 : vector<1x1x128xf32> to vector<1x128xf32>
    %131 = vector.shape_cast %128 : vector<1x128xf32> to vector<1x1x128xf32>
    tpu.vector_store %arg7[%c4_100, %c0_101, %c0_102], %131 {strides = array<i32>} : memref<8x8x128xf32, #tpu.memory_space<vmem>>, vector<1x1x128xf32>,
    %c1_103 = arith.constant 1 : index
    %c4_104 = arith.constant 4 : index
    %132 = memref.load %arg0[%c1_103, %c4_104] : memref<2x8xi32, #tpu.memory_space<smem>>
    %133 = arith.index_cast %132 : i32 to index
    %c0_105 = arith.constant 0 : index
    %c0_106 = arith.constant 0 : index
    %134 = vector.load %arg6[%133, %c0_105, %c0_106] : memref<16x1x128xf32, #tpu.memory_space<vmem>>, vector<1x1x128xf32>
    %135 = vector.shape_cast %134 : vector<1x1x128xf32> to vector<1x128xf32>
    %c4_107 = arith.constant 4 : index
    %c1_108 = arith.constant 1 : index
    %c0_109 = arith.constant 0 : index
    %136 = vector.load %arg7[%c4_107, %c1_108, %c0_109] : memref<8x8x128xf32, #tpu.memory_space<vmem>>, vector<1x1x128xf32>
    %137 = vector.shape_cast %136 : vector<1x1x128xf32> to vector<1x128xf32>
    %138 = vector.shape_cast %135 : vector<1x128xf32> to vector<1x1x128xf32>
    tpu.vector_store %arg7[%c4_107, %c1_108, %c0_109], %138 {strides = array<i32>} : memref<8x8x128xf32, #tpu.memory_space<vmem>>, vector<1x1x128xf32>,
    %c0_110 = arith.constant 0 : index
    %c5_111 = arith.constant 5 : index
    %139 = memref.load %arg0[%c0_110, %c5_111] : memref<2x8xi32, #tpu.memory_space<smem>>
    %140 = arith.index_cast %139 : i32 to index
    %c0_112 = arith.constant 0 : index
    %c0_113 = arith.constant 0 : index
    %141 = vector.load %arg6[%140, %c0_112, %c0_113] : memref<16x1x128xf32, #tpu.memory_space<vmem>>, vector<1x1x128xf32>
    %142 = vector.shape_cast %141 : vector<1x1x128xf32> to vector<1x128xf32>
    %c5_114 = arith.constant 5 : index
    %c0_115 = arith.constant 0 : index
    %c0_116 = arith.constant 0 : index
    %143 = vector.load %arg7[%c5_114, %c0_115, %c0_116] : memref<8x8x128xf32, #tpu.memory_space<vmem>>, vector<1x1x128xf32>
    %144 = vector.shape_cast %143 : vector<1x1x128xf32> to vector<1x128xf32>
    %145 = vector.shape_cast %142 : vector<1x128xf32> to vector<1x1x128xf32>
    tpu.vector_store %arg7[%c5_114, %c0_115, %c0_116], %145 {strides = array<i32>} : memref<8x8x128xf32, #tpu.memory_space<vmem>>, vector<1x1x128xf32>,
    %c1_117 = arith.constant 1 : index
    %c5_118 = arith.constant 5 : index
    %146 = memref.load %arg0[%c1_117, %c5_118] : memref<2x8xi32, #tpu.memory_space<smem>>
    %147 = arith.index_cast %146 : i32 to index
    %c0_119 = arith.constant 0 : index
    %c0_120 = arith.constant 0 : index
    %148 = vector.load %arg6[%147, %c0_119, %c0_120] : memref<16x1x128xf32, #tpu.memory_space<vmem>>, vector<1x1x128xf32>
    %149 = vector.shape_cast %148 : vector<1x1x128xf32> to vector<1x128xf32>
    %c5_121 = arith.constant 5 : index
    %c1_122 = arith.constant 1 : index
    %c0_123 = arith.constant 0 : index
    %150 = vector.load %arg7[%c5_121, %c1_122, %c0_123] : memref<8x8x128xf32, #tpu.memory_space<vmem>>, vector<1x1x128xf32>
    %151 = vector.shape_cast %150 : vector<1x1x128xf32> to vector<1x128xf32>
    %152 = vector.shape_cast %149 : vector<1x128xf32> to vector<1x1x128xf32>
    tpu.vector_store %arg7[%c5_121, %c1_122, %c0_123], %152 {strides = array<i32>} : memref<8x8x128xf32, #tpu.memory_space<vmem>>, vector<1x1x128xf32>,
    %c0_124 = arith.constant 0 : index
    %c6_125 = arith.constant 6 : index
    %153 = memref.load %arg0[%c0_124, %c6_125] : memref<2x8xi32, #tpu.memory_space<smem>>
    %154 = arith.index_cast %153 : i32 to index
    %c0_126 = arith.constant 0 : index
    %c0_127 = arith.constant 0 : index
    %155 = vector.load %arg6[%154, %c0_126, %c0_127] : memref<16x1x128xf32, #tpu.memory_space<vmem>>, vector<1x1x128xf32>
    %156 = vector.shape_cast %155 : vector<1x1x128xf32> to vector<1x128xf32>
    %c6_128 = arith.constant 6 : index
    %c0_129 = arith.constant 0 : index
    %c0_130 = arith.constant 0 : index
    %157 = vector.load %arg7[%c6_128, %c0_129, %c0_130] : memref<8x8x128xf32, #tpu.memory_space<vmem>>, vector<1x1x128xf32>
    %158 = vector.shape_cast %157 : vector<1x1x128xf32> to vector<1x128xf32>
    %159 = vector.shape_cast %156 : vector<1x128xf32> to vector<1x1x128xf32>
    tpu.vector_store %arg7[%c6_128, %c0_129, %c0_130], %159 {strides = array<i32>} : memref<8x8x128xf32, #tpu.memory_space<vmem>>, vector<1x1x128xf32>,
    %c1_131 = arith.constant 1 : index
    %c6_132 = arith.constant 6 : index
    %160 = memref.load %arg0[%c1_131, %c6_132] : memref<2x8xi32, #tpu.memory_space<smem>>
    %161 = arith.index_cast %160 : i32 to index
    %c0_133 = arith.constant 0 : index
    %c0_134 = arith.constant 0 : index
    %162 = vector.load %arg6[%161, %c0_133, %c0_134] : memref<16x1x128xf32, #tpu.memory_space<vmem>>, vector<1x1x128xf32>
    %163 = vector.shape_cast %162 : vector<1x1x128xf32> to vector<1x128xf32>
    %c6_135 = arith.constant 6 : index
    %c1_136 = arith.constant 1 : index
    %c0_137 = arith.constant 0 : index
    %164 = vector.load %arg7[%c6_135, %c1_136, %c0_137] : memref<8x8x128xf32, #tpu.memory_space<vmem>>, vector<1x1x128xf32>
    %165 = vector.shape_cast %164 : vector<1x1x128xf32> to vector<1x128xf32>
    %166 = vector.shape_cast %163 : vector<1x128xf32> to vector<1x1x128xf32>
    tpu.vector_store %arg7[%c6_135, %c1_136, %c0_137], %166 {strides = array<i32>} : memref<8x8x128xf32, #tpu.memory_space<vmem>>, vector<1x1x128xf32>,
    %c0_138 = arith.constant 0 : index
    %c7_139 = arith.constant 7 : index
    %167 = memref.load %arg0[%c0_138, %c7_139] : memref<2x8xi32, #tpu.memory_space<smem>>
    %168 = arith.index_cast %167 : i32 to index
    %c0_140 = arith.constant 0 : index
    %c0_141 = arith.constant 0 : index
    %169 = vector.load %arg6[%168, %c0_140, %c0_141] : memref<16x1x128xf32, #tpu.memory_space<vmem>>, vector<1x1x128xf32>
    %170 = vector.shape_cast %169 : vector<1x1x128xf32> to vector<1x128xf32>
    %c7_142 = arith.constant 7 : index
    %c0_143 = arith.constant 0 : index
    %c0_144 = arith.constant 0 : index
    %171 = vector.load %arg7[%c7_142, %c0_143, %c0_144] : memref<8x8x128xf32, #tpu.memory_space<vmem>>, vector<1x1x128xf32>
    %172 = vector.shape_cast %171 : vector<1x1x128xf32> to vector<1x128xf32>
    %173 = vector.shape_cast %170 : vector<1x128xf32> to vector<1x1x128xf32>
    tpu.vector_store %arg7[%c7_142, %c0_143, %c0_144], %173 {strides = array<i32>} : memref<8x8x128xf32, #tpu.memory_space<vmem>>, vector<1x1x128xf32>,
    %c1_145 = arith.constant 1 : index
    %c7_146 = arith.constant 7 : index
    %174 = memref.load %arg0[%c1_145, %c7_146] : memref<2x8xi32, #tpu.memory_space<smem>>
    %175 = arith.index_cast %174 : i32 to index
    %c0_147 = arith.constant 0 : index
    %c0_148 = arith.constant 0 : index
    %176 = vector.load %arg6[%175, %c0_147, %c0_148] : memref<16x1x128xf32, #tpu.memory_space<vmem>>, vector<1x1x128xf32>
    %177 = vector.shape_cast %176 : vector<1x1x128xf32> to vector<1x128xf32>
    %c7_149 = arith.constant 7 : index
    %c1_150 = arith.constant 1 : index
    %c0_151 = arith.constant 0 : index
    %178 = vector.load %arg7[%c7_149, %c1_150, %c0_151] : memref<8x8x128xf32, #tpu.memory_space<vmem>>, vector<1x1x128xf32>
    %179 = vector.shape_cast %178 : vector<1x1x128xf32> to vector<1x128xf32>
    %180 = vector.shape_cast %177 : vector<1x128xf32> to vector<1x1x128xf32>
    tpu.vector_store %arg7[%c7_149, %c1_150, %c0_151], %180 {strides = array<i32>} : memref<8x8x128xf32, #tpu.memory_space<vmem>>, vector<1x1x128xf32>,
    %cst_152 = arith.constant 0.000000e+00 : f32
    %181 = vector.broadcast %cst_152 : f32 to vector<8x128xf32>
    %cst_153 = arith.constant 0.000000e+00 : f32
    %182 = vector.broadcast %cst_153 : f32 to vector<8x128xf32>
    %183 = tpu.concatenate %181, %182 in 1 : vector<8x128xf32>, vector<8x128xf32> -> vector<8x256xf32>
    %c0_154 = arith.constant 0 : index
    %c0_155 = arith.constant 0 : index
    %184 = vector.load %arg3[%c0_154, %c0_155] : memref<256x256xf32, #tpu.memory_space<vmem>>, vector<256x256xf32>
    %cst_156 = arith.constant dense<0.000000e+00> : vector<8x256xf32>
    %185 = tpu.matmul %183, %184, %cst_156 {dimension_numbers = #tpu.dot_dimension_numbers<[1], [0], [0], [1], [0, 0, 1, 1], [], []>} : vector<8x256xf32>, vector<256x256xf32>, vector<8x256xf32> -> vector<8x256xf32>
    %c0_157 = arith.constant 0 : index
    %c0_158 = arith.constant 0 : index
    %186 = vector.load %arg4[%c0_157, %c0_158] : memref<1x256xf32, #tpu.memory_space<vmem>>, vector<1x256xf32>
    %187 = vector.broadcast %186 : vector<1x256xf32> to vector<8x256xf32>
    %188 = arith.addf %185, %187 : vector<8x256xf32>
    %189 = vector.extract_strided_slice %188 {offsets = [0, 0], sizes = [8, 128], strides = [1, 1]} : vector<8x256xf32> to vector<8x128xf32>
    %c0_159 = arith.constant 0 : index
    %c0_160 = arith.constant 0 : index
    %c0_161 = arith.constant 0 : index
    %190 = vector.load %arg7[%c0_159, %c0_160, %c0_161] : memref<8x8x128xf32, #tpu.memory_space<vmem>>, vector<1x8x128xf32>
    %191 = vector.shape_cast %190 : vector<1x8x128xf32> to vector<8x128xf32>
    %192 = arith.addf %189, %191 : vector<8x128xf32>
    %193 = math.tanh %192 : vector<8x128xf32>
    %194 = tpu.concatenate %193, %182 in 1 : vector<8x128xf32>, vector<8x128xf32> -> vector<8x256xf32>
    %c0_162 = arith.constant 0 : index
    %c0_163 = arith.constant 0 : index
    %195 = vector.load %arg3[%c0_162, %c0_163] : memref<256x256xf32, #tpu.memory_space<vmem>>, vector<256x256xf32>
    %cst_164 = arith.constant dense<0.000000e+00> : vector<8x256xf32>
    %196 = tpu.matmul %194, %195, %cst_164 {dimension_numbers = #tpu.dot_dimension_numbers<[1], [0], [0], [1], [0, 0, 1, 1], [], []>} : vector<8x256xf32>, vector<256x256xf32>, vector<8x256xf32> -> vector<8x256xf32>
    %c0_165 = arith.constant 0 : index
    %c0_166 = arith.constant 0 : index
    %197 = vector.load %arg4[%c0_165, %c0_166] : memref<1x256xf32, #tpu.memory_space<vmem>>, vector<1x256xf32>
    %198 = vector.broadcast %197 : vector<1x256xf32> to vector<8x256xf32>
    %199 = arith.addf %196, %198 : vector<8x256xf32>
    %200 = vector.extract_strided_slice %199 {offsets = [0, 0], sizes = [8, 128], strides = [1, 1]} : vector<8x256xf32> to vector<8x128xf32>
    %c1_167 = arith.constant 1 : index
    %c0_168 = arith.constant 0 : index
    %c0_169 = arith.constant 0 : index
    %201 = vector.load %arg7[%c1_167, %c0_168, %c0_169] : memref<8x8x128xf32, #tpu.memory_space<vmem>>, vector<1x8x128xf32>
    %202 = vector.shape_cast %201 : vector<1x8x128xf32> to vector<8x128xf32>
    %203 = arith.addf %200, %202 : vector<8x128xf32>
    %204 = math.tanh %203 : vector<8x128xf32>
    %205 = vector.extract_strided_slice %199 {offsets = [0, 128], sizes = [8, 128], strides = [1, 1]} : vector<8x256xf32> to vector<8x128xf32>
    %206 = math.tanh %205 : vector<8x128xf32>
    %207 = tpu.concatenate %204, %206 in 1 : vector<8x128xf32>, vector<8x128xf32> -> vector<8x256xf32>
    %c0_170 = arith.constant 0 : index
    %c0_171 = arith.constant 0 : index
    %208 = vector.load %arg3[%c0_170, %c0_171] : memref<256x256xf32, #tpu.memory_space<vmem>>, vector<256x256xf32>
    %cst_172 = arith.constant dense<0.000000e+00> : vector<8x256xf32>
    %209 = tpu.matmul %207, %208, %cst_172 {dimension_numbers = #tpu.dot_dimension_numbers<[1], [0], [0], [1], [0, 0, 1, 1], [], []>} : vector<8x256xf32>, vector<256x256xf32>, vector<8x256xf32> -> vector<8x256xf32>
    %c0_173 = arith.constant 0 : index
    %c0_174 = arith.constant 0 : index
    %210 = vector.load %arg4[%c0_173, %c0_174] : memref<1x256xf32, #tpu.memory_space<vmem>>, vector<1x256xf32>
    %211 = vector.broadcast %210 : vector<1x256xf32> to vector<8x256xf32>
    %212 = arith.addf %209, %211 : vector<8x256xf32>
    %213 = vector.extract_strided_slice %212 {offsets = [0, 0], sizes = [8, 128], strides = [1, 1]} : vector<8x256xf32> to vector<8x128xf32>
    %c2_175 = arith.constant 2 : index
    %c0_176 = arith.constant 0 : index
    %c0_177 = arith.constant 0 : index
    %214 = vector.load %arg7[%c2_175, %c0_176, %c0_177] : memref<8x8x128xf32, #tpu.memory_space<vmem>>, vector<1x8x128xf32>
    %215 = vector.shape_cast %214 : vector<1x8x128xf32> to vector<8x128xf32>
    %216 = arith.addf %213, %215 : vector<8x128xf32>
    %217 = math.tanh %216 : vector<8x128xf32>
    %218 = vector.extract_strided_slice %212 {offsets = [0, 128], sizes = [8, 128], strides = [1, 1]} : vector<8x256xf32> to vector<8x128xf32>
    %219 = math.tanh %218 : vector<8x128xf32>
    %220 = tpu.concatenate %217, %219 in 1 : vector<8x128xf32>, vector<8x128xf32> -> vector<8x256xf32>
    %c0_178 = arith.constant 0 : index
    %c0_179 = arith.constant 0 : index
    %221 = vector.load %arg3[%c0_178, %c0_179] : memref<256x256xf32, #tpu.memory_space<vmem>>, vector<256x256xf32>
    %cst_180 = arith.constant dense<0.000000e+00> : vector<8x256xf32>
    %222 = tpu.matmul %220, %221, %cst_180 {dimension_numbers = #tpu.dot_dimension_numbers<[1], [0], [0], [1], [0, 0, 1, 1], [], []>} : vector<8x256xf32>, vector<256x256xf32>, vector<8x256xf32> -> vector<8x256xf32>
    %c0_181 = arith.constant 0 : index
    %c0_182 = arith.constant 0 : index
    %223 = vector.load %arg4[%c0_181, %c0_182] : memref<1x256xf32, #tpu.memory_space<vmem>>, vector<1x256xf32>
    %224 = vector.broadcast %223 : vector<1x256xf32> to vector<8x256xf32>
    %225 = arith.addf %222, %224 : vector<8x256xf32>
    %226 = vector.extract_strided_slice %225 {offsets = [0, 0], sizes = [8, 128], strides = [1, 1]} : vector<8x256xf32> to vector<8x128xf32>
    %c3_183 = arith.constant 3 : index
    %c0_184 = arith.constant 0 : index
    %c0_185 = arith.constant 0 : index
    %227 = vector.load %arg7[%c3_183, %c0_184, %c0_185] : memref<8x8x128xf32, #tpu.memory_space<vmem>>, vector<1x8x128xf32>
    %228 = vector.shape_cast %227 : vector<1x8x128xf32> to vector<8x128xf32>
    %229 = arith.addf %226, %228 : vector<8x128xf32>
    %230 = math.tanh %229 : vector<8x128xf32>
    %231 = vector.extract_strided_slice %225 {offsets = [0, 128], sizes = [8, 128], strides = [1, 1]} : vector<8x256xf32> to vector<8x128xf32>
    %232 = math.tanh %231 : vector<8x128xf32>
    %233 = tpu.concatenate %230, %232 in 1 : vector<8x128xf32>, vector<8x128xf32> -> vector<8x256xf32>
    %c0_186 = arith.constant 0 : index
    %c0_187 = arith.constant 0 : index
    %234 = vector.load %arg3[%c0_186, %c0_187] : memref<256x256xf32, #tpu.memory_space<vmem>>, vector<256x256xf32>
    %cst_188 = arith.constant dense<0.000000e+00> : vector<8x256xf32>
    %235 = tpu.matmul %233, %234, %cst_188 {dimension_numbers = #tpu.dot_dimension_numbers<[1], [0], [0], [1], [0, 0, 1, 1], [], []>} : vector<8x256xf32>, vector<256x256xf32>, vector<8x256xf32> -> vector<8x256xf32>
    %c0_189 = arith.constant 0 : index
    %c0_190 = arith.constant 0 : index
    %236 = vector.load %arg4[%c0_189, %c0_190] : memref<1x256xf32, #tpu.memory_space<vmem>>, vector<1x256xf32>
    %237 = vector.broadcast %236 : vector<1x256xf32> to vector<8x256xf32>
    %238 = arith.addf %235, %237 : vector<8x256xf32>
    %239 = vector.extract_strided_slice %238 {offsets = [0, 0], sizes = [8, 128], strides = [1, 1]} : vector<8x256xf32> to vector<8x128xf32>
    %c4_191 = arith.constant 4 : index
    %c0_192 = arith.constant 0 : index
    %c0_193 = arith.constant 0 : index
    %240 = vector.load %arg7[%c4_191, %c0_192, %c0_193] : memref<8x8x128xf32, #tpu.memory_space<vmem>>, vector<1x8x128xf32>
    %241 = vector.shape_cast %240 : vector<1x8x128xf32> to vector<8x128xf32>
    %242 = arith.addf %239, %241 : vector<8x128xf32>
    %243 = math.tanh %242 : vector<8x128xf32>
    %244 = vector.extract_strided_slice %238 {offsets = [0, 128], sizes = [8, 128], strides = [1, 1]} : vector<8x256xf32> to vector<8x128xf32>
    %245 = math.tanh %244 : vector<8x128xf32>
    %246 = tpu.concatenate %243, %245 in 1 : vector<8x128xf32>, vector<8x128xf32> -> vector<8x256xf32>
    %c0_194 = arith.constant 0 : index
    %c0_195 = arith.constant 0 : index
    %247 = vector.load %arg3[%c0_194, %c0_195] : memref<256x256xf32, #tpu.memory_space<vmem>>, vector<256x256xf32>
    %cst_196 = arith.constant dense<0.000000e+00> : vector<8x256xf32>
    %248 = tpu.matmul %246, %247, %cst_196 {dimension_numbers = #tpu.dot_dimension_numbers<[1], [0], [0], [1], [0, 0, 1, 1], [], []>} : vector<8x256xf32>, vector<256x256xf32>, vector<8x256xf32> -> vector<8x256xf32>
    %c0_197 = arith.constant 0 : index
    %c0_198 = arith.constant 0 : index
    %249 = vector.load %arg4[%c0_197, %c0_198] : memref<1x256xf32, #tpu.memory_space<vmem>>, vector<1x256xf32>
    %250 = vector.broadcast %249 : vector<1x256xf32> to vector<8x256xf32>
    %251 = arith.addf %248, %250 : vector<8x256xf32>
    %252 = vector.extract_strided_slice %251 {offsets = [0, 0], sizes = [8, 128], strides = [1, 1]} : vector<8x256xf32> to vector<8x128xf32>
    %c5_199 = arith.constant 5 : index
    %c0_200 = arith.constant 0 : index
    %c0_201 = arith.constant 0 : index
    %253 = vector.load %arg7[%c5_199, %c0_200, %c0_201] : memref<8x8x128xf32, #tpu.memory_space<vmem>>, vector<1x8x128xf32>
    %254 = vector.shape_cast %253 : vector<1x8x128xf32> to vector<8x128xf32>
    %255 = arith.addf %252, %254 : vector<8x128xf32>
    %256 = math.tanh %255 : vector<8x128xf32>
    %257 = vector.extract_strided_slice %251 {offsets = [0, 128], sizes = [8, 128], strides = [1, 1]} : vector<8x256xf32> to vector<8x128xf32>
    %258 = math.tanh %257 : vector<8x128xf32>
    %259 = tpu.concatenate %256, %258 in 1 : vector<8x128xf32>, vector<8x128xf32> -> vector<8x256xf32>
    %c0_202 = arith.constant 0 : index
    %c0_203 = arith.constant 0 : index
    %260 = vector.load %arg3[%c0_202, %c0_203] : memref<256x256xf32, #tpu.memory_space<vmem>>, vector<256x256xf32>
    %cst_204 = arith.constant dense<0.000000e+00> : vector<8x256xf32>
    %261 = tpu.matmul %259, %260, %cst_204 {dimension_numbers = #tpu.dot_dimension_numbers<[1], [0], [0], [1], [0, 0, 1, 1], [], []>} : vector<8x256xf32>, vector<256x256xf32>, vector<8x256xf32> -> vector<8x256xf32>
    %c0_205 = arith.constant 0 : index
    %c0_206 = arith.constant 0 : index
    %262 = vector.load %arg4[%c0_205, %c0_206] : memref<1x256xf32, #tpu.memory_space<vmem>>, vector<1x256xf32>
    %263 = vector.broadcast %262 : vector<1x256xf32> to vector<8x256xf32>
    %264 = arith.addf %261, %263 : vector<8x256xf32>
    %265 = vector.extract_strided_slice %264 {offsets = [0, 0], sizes = [8, 128], strides = [1, 1]} : vector<8x256xf32> to vector<8x128xf32>
    %c6_207 = arith.constant 6 : index
    %c0_208 = arith.constant 0 : index
    %c0_209 = arith.constant 0 : index
    %266 = vector.load %arg7[%c6_207, %c0_208, %c0_209] : memref<8x8x128xf32, #tpu.memory_space<vmem>>, vector<1x8x128xf32>
    %267 = vector.shape_cast %266 : vector<1x8x128xf32> to vector<8x128xf32>
    %268 = arith.addf %265, %267 : vector<8x128xf32>
    %269 = math.tanh %268 : vector<8x128xf32>
    %270 = vector.extract_strided_slice %264 {offsets = [0, 128], sizes = [8, 128], strides = [1, 1]} : vector<8x256xf32> to vector<8x128xf32>
    %271 = math.tanh %270 : vector<8x128xf32>
    %272 = tpu.concatenate %269, %271 in 1 : vector<8x128xf32>, vector<8x128xf32> -> vector<8x256xf32>
    %c0_210 = arith.constant 0 : index
    %c0_211 = arith.constant 0 : index
    %273 = vector.load %arg3[%c0_210, %c0_211] : memref<256x256xf32, #tpu.memory_space<vmem>>, vector<256x256xf32>
    %cst_212 = arith.constant dense<0.000000e+00> : vector<8x256xf32>
    %274 = tpu.matmul %272, %273, %cst_212 {dimension_numbers = #tpu.dot_dimension_numbers<[1], [0], [0], [1], [0, 0, 1, 1], [], []>} : vector<8x256xf32>, vector<256x256xf32>, vector<8x256xf32> -> vector<8x256xf32>
    %c0_213 = arith.constant 0 : index
    %c0_214 = arith.constant 0 : index
    %275 = vector.load %arg4[%c0_213, %c0_214] : memref<1x256xf32, #tpu.memory_space<vmem>>, vector<1x256xf32>
    %276 = vector.broadcast %275 : vector<1x256xf32> to vector<8x256xf32>
    %277 = arith.addf %274, %276 : vector<8x256xf32>
    %278 = vector.extract_strided_slice %277 {offsets = [0, 0], sizes = [8, 128], strides = [1, 1]} : vector<8x256xf32> to vector<8x128xf32>
    %c7_215 = arith.constant 7 : index
    %c0_216 = arith.constant 0 : index
    %c0_217 = arith.constant 0 : index
    %279 = vector.load %arg7[%c7_215, %c0_216, %c0_217] : memref<8x8x128xf32, #tpu.memory_space<vmem>>, vector<1x8x128xf32>
    %280 = vector.shape_cast %279 : vector<1x8x128xf32> to vector<8x128xf32>
    %281 = arith.addf %278, %280 : vector<8x128xf32>
    %282 = math.tanh %281 : vector<8x128xf32>
    %283 = vector.extract_strided_slice %277 {offsets = [0, 128], sizes = [8, 128], strides = [1, 1]} : vector<8x256xf32> to vector<8x128xf32>
    %284 = math.tanh %283 : vector<8x128xf32>
    %285 = tpu.concatenate %282, %284 in 1 : vector<8x128xf32>, vector<8x128xf32> -> vector<8x256xf32>
    %c0_218 = arith.constant 0 : index
    %c0_219 = arith.constant 0 : index
    %286 = vector.load %arg3[%c0_218, %c0_219] : memref<256x256xf32, #tpu.memory_space<vmem>>, vector<256x256xf32>
    %cst_220 = arith.constant dense<0.000000e+00> : vector<8x256xf32>
    %287 = tpu.matmul %285, %286, %cst_220 {dimension_numbers = #tpu.dot_dimension_numbers<[1], [0], [0], [1], [0, 0, 1, 1], [], []>} : vector<8x256xf32>, vector<256x256xf32>, vector<8x256xf32> -> vector<8x256xf32>
    %c0_221 = arith.constant 0 : index
    %c0_222 = arith.constant 0 : index
    %288 = vector.load %arg4[%c0_221, %c0_222] : memref<1x256xf32, #tpu.memory_space<vmem>>, vector<1x256xf32>
    %289 = vector.broadcast %288 : vector<1x256xf32> to vector<8x256xf32>
    %290 = arith.addf %287, %289 : vector<8x256xf32>
    %291 = vector.extract_strided_slice %290 {offsets = [0, 128], sizes = [8, 128], strides = [1, 1]} : vector<8x256xf32> to vector<8x128xf32>
    %292 = math.tanh %291 : vector<8x128xf32>
    %c0_223 = arith.constant 0 : index
    %c0_224 = arith.constant 0 : index
    %c0_225 = arith.constant 0 : index
    %293 = vector.load %arg5[%c0_223, %c0_224, %c0_225] : memref<2x8x128xf32, #tpu.memory_space<vmem>>, vector<1x8x128xf32>
    %294 = vector.shape_cast %293 : vector<1x8x128xf32> to vector<8x128xf32>
    %295 = vector.shape_cast %282 : vector<8x128xf32> to vector<1x8x128xf32>
    tpu.vector_store %arg5[%c0_223, %c0_224, %c0_225], %295 {strides = array<i32>} : memref<2x8x128xf32, #tpu.memory_space<vmem>>, vector<1x8x128xf32>,
    %c1_226 = arith.constant 1 : index
    %c0_227 = arith.constant 0 : index
    %c0_228 = arith.constant 0 : index
    %296 = vector.load %arg5[%c1_226, %c0_227, %c0_228] : memref<2x8x128xf32, #tpu.memory_space<vmem>>, vector<1x8x128xf32>
    %297 = vector.shape_cast %296 : vector<1x8x128xf32> to vector<8x128xf32>
    %298 = vector.shape_cast %292 : vector<8x128xf32> to vector<1x8x128xf32>
    tpu.vector_store %arg5[%c1_226, %c0_227, %c0_228], %298 {strides = array<i32>} : memref<2x8x128xf32, #tpu.memory_space<vmem>>, vector<1x8x128xf32>,
    return
  }
}

</mosaic_0001>

<llo_original>
// kernel: tpu_custom_call.1
$region0: #{tpu_custom_call.1}
  #allocation0 [shape = 'u32[]', space=smem, size = 0x4, offset = 0x4, fixed_abs, tag = 'smem constant byte address 0x4 - core index']
  #allocation1 [shape = 'u32[144,128]{1,0:T(1,128)}', space=vmem, size = 0x12000, scoped, tag = 'internal scratch']
  #allocation2 [shape = 'f32[16,1,128]{2,1,0:T(1,128)}', space=vmem, size = 0x2000, scoped, tag = 'scratch operand']
  #allocation3 [shape = 'f32[8,8,128]{2,1,0:T(8,128)}', space=vmem, size = 0x8000, scoped, tag = 'scratch operand']
  %s0 = inlined_call_operand.hbm [shape: s32[2,8], index: 0, kind: input, shape index: {}]
  %s1 = inlined_call_operand.hbm [shape: f32[16,128], index: 1, kind: input, shape index: {}]
  %s2 = inlined_call_operand.hbm [shape: f32[128,128], index: 2, kind: input, shape index: {}]
  %s3 = inlined_call_operand.hbm [shape: f32[256,256], index: 3, kind: input, shape index: {}]
  %s4 = inlined_call_operand.vmem [shape: f32[1,256], index: 4, kind: input, shape index: {}]
  %s5 = inlined_call_operand.hbm [shape: f32[2,8,128], index: 5, kind: output, shape index: {}]
  %s6 = sld [smem:[#allocation0]]
  $region46: #{tpu_custom_call.1} parent=0
    _
  %s8 = ssub.s32 1, %s6
  %s9 = scalar_select 0, %s8, %s6
  $region1: #{tpu_custom_call.1} parent=0
    #allocation4 [shape = 'u8[1024]{0}', space=smem, size = 0x400, scoped, tag = 'input window, operand 0, single buffered']
    #allocation5 [shape = 's32[1]{0}', space=sflag, size = 0x4, scoped, tag = 'scoped memory for tpu_custom_call.1']
    #allocation6 [shape = 's32[1]{0}', space=sflag, size = 0x4, scoped, tag = 'scoped memory for tpu_custom_call.1']
    #allocation7 [shape = 's32[1]{0}', space=sflag, size = 0x4, scoped, tag = 'scoped memory for tpu_custom_call.1']
    #allocation8 [shape = 'u8[8192]{0}', space=vmem, size = 0x2000, scoped, tag = 'input window, operand 1, single buffered']
    #allocation9 [shape = 'u8[65536]{0}', space=vmem, size = 0x10000, scoped, tag = 'input window, operand 2, single buffered']
    #allocation10 [shape = 's32[1]{0}', space=sflag, size = 0x4, scoped, tag = 'scoped memory for tpu_custom_call.1']
    #allocation11 [shape = 'u8[262144]{0}', space=vmem, size = 0x40000, scoped, tag = 'input window, operand 3, single buffered']
    #allocation12 [shape = 'u8[8192]{0}', space=vmem, size = 0x2000, scoped, tag = 'output window, operand 0, single buffered']
    %10 = vsyncpa [#allocation7], 0
    %11 = vsyncpa [#allocation5], 0
    %12 = vsyncpa [#allocation10], 0
    %13 = vsyncpa [#allocation6], 0
    // Predicated region
    $region2: #{tpu_custom_call.1} parent=1 // pred_check
      _
    $region3: #{tpu_custom_call.1} parent=1 // pred_check_branch
      %15 = sbr.rel (0) target = $region5
    $region4: #{tpu_custom_call.1} parent=1 // pred_region
      %s17 = ssub.s32 32, 32
      %18 = vsyncadd [#allocation7], %s17
      %21 = dma.hbm_to_smem %s0, 32, [#allocation4], [#allocation7]
    $region5: #{tpu_custom_call.1} parent=1 // pred_fallthru
      _
    // Predicated region
    $region6: #{tpu_custom_call.1} parent=1 // pred_check
      _
    $region7: #{tpu_custom_call.1} parent=1 // pred_check_branch
      %23 = sbr.rel (0) target = $region9
    $region8: #{tpu_custom_call.1} parent=1 // pred_region
      %s25 = ssub.s32 256, 256
      %26 = vsyncadd [#allocation5], %s25
      %s27 = sshll.u32 [#allocation8], 4
      %s28 = int_to_ptr.vmem [resolvable:$true] %s27
      %33 = dma.hbm_to_vmem [thread:$0]  %s1, 256, %s28, [#allocation5], 128, 128, 8
    $region9: #{tpu_custom_call.1} parent=1 // pred_fallthru
      _
    // Predicated region
    $region10: #{tpu_custom_call.1} parent=1 // pred_check
      _
    $region11: #{tpu_custom_call.1} parent=1 // pred_check_branch
      %35 = sbr.rel (0) target = $region13
    $region12: #{tpu_custom_call.1} parent=1 // pred_region
      %s37 = ssub.s32 2048, 2048
      %38 = vsyncadd [#allocation10], %s37
      %s39 = sshll.u32 [#allocation9], 4
      %s40 = int_to_ptr.vmem [resolvable:$true] %s39
      %45 = dma.hbm_to_vmem [thread:$0]  %s2, 2048, %s40, [#allocation10], 128, 128, 8
    $region13: #{tpu_custom_call.1} parent=1 // pred_fallthru
      _
    // Predicated region
    $region14: #{tpu_custom_call.1} parent=1 // pred_check
      _
    $region15: #{tpu_custom_call.1} parent=1 // pred_check_branch
      %47 = sbr.rel (0) target = $region17
    $region16: #{tpu_custom_call.1} parent=1 // pred_region
      %s49 = ssub.s32 8192, 8192
      %50 = vsyncadd [#allocation10], %s49
      %s51 = sshll.u32 [#allocation11], 4
      %s52 = int_to_ptr.vmem [resolvable:$true] %s51
      %57 = dma.hbm_to_vmem [thread:$0]  %s3, 8192, %s52, [#allocation10], 256, 256, 16
    $region17: #{tpu_custom_call.1} parent=1 // pred_fallthru
      _
    // Predicated region
    $region18: #{tpu_custom_call.1} parent=1 // pred_check
      _
    $region19: #{tpu_custom_call.1} parent=1 // pred_check_branch
      %59 = sbr.rel (0) target = $region21
    $region20: #{tpu_custom_call.1} parent=1 // pred_region
      _
    $region21: #{tpu_custom_call.1} parent=1 // pred_fallthru
      _
    // Predicated region
    $region22: #{tpu_custom_call.1} parent=1 // pred_check
      _
    $region23: #{tpu_custom_call.1} parent=1 // pred_check_branch
      %61 = sbr.rel (0) target = $region25
    $region24: #{tpu_custom_call.1} parent=1 // pred_region
      %62 = dma.done [#allocation7], 32
    $region25: #{tpu_custom_call.1} parent=1 // pred_fallthru
      _
    // Predicated region
    $region26: #{tpu_custom_call.1} parent=1 // pred_check
      _
    $region27: #{tpu_custom_call.1} parent=1 // pred_check_branch
      %64 = sbr.rel (0) target = $region29
    $region28: #{tpu_custom_call.1} parent=1 // pred_region
      %65 = dma.done [#allocation5], 256
    $region29: #{tpu_custom_call.1} parent=1 // pred_fallthru
      _
    // Predicated region
    $region30: #{tpu_custom_call.1} parent=1 // pred_check
      _
    $region31: #{tpu_custom_call.1} parent=1 // pred_check_branch
      %67 = sbr.rel (0) target = $region33
    $region32: #{tpu_custom_call.1} parent=1 // pred_region
      %68 = dma.done [#allocation10], 2048
    $region33: #{tpu_custom_call.1} parent=1 // pred_fallthru
      _
    // Predicated region
    $region34: #{tpu_custom_call.1} parent=1 // pred_check
      _
    $region35: #{tpu_custom_call.1} parent=1 // pred_check_branch
      %70 = sbr.rel (0) target = $region37
    $region36: #{tpu_custom_call.1} parent=1 // pred_region
      %71 = dma.done [#allocation10], 8192
    $region37: #{tpu_custom_call.1} parent=1 // pred_fallthru
      _
    %72 = sfence
    %v73 = vld [vmem:[#allocation8] sm:$0xff]
    %v74 = vld [vmem:[#allocation8 + $0x8] sm:$0xff]
    %v75 = vld [vmem:[#allocation9] sm:$0xff]
    %v76 = vld [vmem:[#allocation9 + $0x8] sm:$0xff]
    %v77 = vld [vmem:[#allocation9 + $0x10] sm:$0xff]
    %v78 = vld [vmem:[#allocation9 + $0x18] sm:$0xff]
    %v79 = vld [vmem:[#allocation9 + $0x20] sm:$0xff]
    %v80 = vld [vmem:[#allocation9 + $0x28] sm:$0xff]
    %v81 = vld [vmem:[#allocation9 + $0x30] sm:$0xff]
    %v82 = vld [vmem:[#allocation9 + $0x38] sm:$0xff]
    %v83 = vld [vmem:[#allocation9 + $0x40] sm:$0xff]
    %v84 = vld [vmem:[#allocation9 + $0x48] sm:$0xff]
    %v85 = vld [vmem:[#allocation9 + $0x50] sm:$0xff]
    %v86 = vld [vmem:[#allocation9 + $0x58] sm:$0xff]
    %v87 = vld [vmem:[#allocation9 + $0x60] sm:$0xff]
    %v88 = vld [vmem:[#allocation9 + $0x68] sm:$0xff]
    %v89 = vld [vmem:[#allocation9 + $0x70] sm:$0xff]
    %v90 = vld [vmem:[#allocation9 + $0x78] sm:$0xff]
    %91 = vmatprep.subr.mxu0 0.0
    %92 = vmatpush1.msra.mxu0 %v75
    %93 = vmatprep.subr.mxu0 0.0
    %94 = vmatpush1.msra.mxu0 %v76
    %95 = vmatprep.subr.mxu0 0.0
    %96 = vmatpush1.msra.mxu0 %v77
    %97 = vmatprep.subr.mxu0 0.0
    %98 = vmatpush1.msra.mxu0 %v78
    %99 = vmatprep.subr.mxu0 0.0
    %100 = vmatpush1.msra.mxu0 %v79
    %101 = vmatprep.subr.mxu0 0.0
    %102 = vmatpush1.msra.mxu0 %v80
    %103 = vmatprep.subr.mxu0 0.0
    %104 = vmatpush1.msra.mxu0 %v81
    %105 = vmatprep.subr.mxu0 0.0
    %106 = vmatpush1.msra.mxu0 %v82
    %107 = vmatprep.subr.mxu0 0.0
    %108 = vmatpush1.msra.mxu0 %v83
    %109 = vmatprep.subr.mxu0 0.0
    %110 = vmatpush1.msra.mxu0 %v84
    %111 = vmatprep.subr.mxu0 0.0
    %112 = vmatpush1.msra.mxu0 %v85
    %113 = vmatprep.subr.mxu0 0.0
    %114 = vmatpush1.msra.mxu0 %v86
    %115 = vmatprep.subr.mxu0 0.0
    %116 = vmatpush1.msra.mxu0 %v87
    %117 = vmatprep.subr.mxu0 0.0
    %118 = vmatpush1.msra.mxu0 %v88
    %119 = vmatprep.subr.mxu0 0.0
    %120 = vmatpush1.msra.mxu0 %v89
    %121 = vmatprep.subr.mxu0 0.0
    %122 = vmatpush1.msra.mxu0 %v90
    %123 = vmatprep.subr.mxu0 0.0
    %124 = vmatpush1.msra.mxu0 0.0
    %125 = vmatprep.subr.mxu0 0.0
    %126 = vmatpush1.msra.mxu0 0.0
    %127 = vmatprep.subr.mxu0 0.0
    %128 = vmatpush1.msra.mxu0 0.0
    %129 = vmatprep.subr.mxu0 0.0
    %130 = vmatpush1.msra.mxu0 0.0
    %131 = vmatprep.subr.mxu0 0.0
    %132 = vmatpush1.msra.mxu0 0.0
    %133 = vmatprep.subr.mxu0 0.0
    %134 = vmatpush1.msra.mxu0 0.0
    %135 = vmatprep.subr.mxu0 0.0
    %136 = vmatpush1.msra.mxu0 0.0
    %137 = vmatprep.subr.mxu0 0.0
    %138 = vmatpush1.msra.mxu0 0.0
    %139 = vmatprep.subr.mxu0 0.0
    %140 = vmatpush1.msra.mxu0 0.0
    %141 = vmatprep.subr.mxu0 0.0
    %142 = vmatpush1.msra.mxu0 0.0
    %143 = vmatprep.subr.mxu0 0.0
    %144 = vmatpush1.msra.mxu0 0.0
    %145 = vmatprep.subr.mxu0 0.0
    %146 = vmatpush1.msra.mxu0 0.0
    %147 = vmatprep.subr.mxu0 0.0
    %148 = vmatpush1.msra.mxu0 0.0
    %149 = vmatprep.subr.mxu0 0.0
    %150 = vmatpush1.msra.mxu0 0.0
    %151 = vmatprep.subr.mxu0 0.0
    %152 = vmatpush1.msra.mxu0 0.0
    %153 = vmatprep.subr.mxu0 0.0
    %154 = vmatpush1.msra.mxu0 0.0
    %155 = vmatprep.mubr.f32.mxu0 0.0
    %156 = vmatmul.mubr.f32.gmra.mrb[0].mxu0 %v73
    %v157 = vpop.f32.mrb[0].mxu0
    %v158 = vadd.f32 0.0, %v157
    %v159 = vpop.f32.mrb[0].mxu0
    %160 = vmatprep.mubr.f32.mxu0 0.0
    %161 = vmatmul.mubr.f32.gmra.mrb[0].mxu0 %v74
    %v162 = vpop.f32.mrb[0].mxu0
    %v163 = vadd.f32 0.0, %v162
    %v164 = vpop.f32.mrb[0].mxu0
    %165 = vdwg.mxu0
    %166 = vst [vmem:[#allocation2] sm:$0x1] %v158
    %s167 = scalar_lea.vmem [#allocation2], 1
    %168 = vst [vmem:[%s167 - $0x1] sm:$0x2] %v158
    %s169 = scalar_lea.vmem [#allocation2], 2
    %170 = vst [vmem:[%s169 - $0x2] sm:$0x4] %v158
    %s171 = scalar_lea.vmem [#allocation2], 3
    %172 = vst [vmem:[%s171 - $0x3] sm:$0x8] %v158
    %s173 = scalar_lea.vmem [#allocation2], 4
    %174 = vst [vmem:[%s173 - $0x4] sm:$0x10] %v158
    %s175 = scalar_lea.vmem [#allocation2], 5
    %176 = vst [vmem:[%s175 - $0x5] sm:$0x20] %v158
    %s177 = scalar_lea.vmem [#allocation2], 6
    %178 = vst [vmem:[%s177 - $0x6] sm:$0x40] %v158
    %s179 = scalar_lea.vmem [#allocation2], 7
    %180 = vst [vmem:[%s179 - $0x7] sm:$0x80] %v158
    %s181 = scalar_lea.vmem [#allocation2], 8
    %182 = vst [vmem:[%s181] sm:$0x1] %v163
    %s183 = scalar_lea.vmem [#allocation2], 9
    %184 = vst [vmem:[%s183 - $0x1] sm:$0x2] %v163
    %s185 = scalar_lea.vmem [#allocation2], 10
    %186 = vst [vmem:[%s185 - $0x2] sm:$0x4] %v163
    %s187 = scalar_lea.vmem [#allocation2], 11
    %188 = vst [vmem:[%s187 - $0x3] sm:$0x8] %v163
    %s189 = scalar_lea.vmem [#allocation2], 12
    %190 = vst [vmem:[%s189 - $0x4] sm:$0x10] %v163
    %s191 = scalar_lea.vmem [#allocation2], 13
    %192 = vst [vmem:[%s191 - $0x5] sm:$0x20] %v163
    %s193 = scalar_lea.vmem [#allocation2], 14
    %194 = vst [vmem:[%s193 - $0x6] sm:$0x40] %v163
    %s195 = scalar_lea.vmem [#allocation2], 15
    %196 = vst [vmem:[%s195 - $0x7] sm:$0x80] %v163
    %197 = vst [vmem:[#allocation3] sm:$0xff] 0.0
    %198 = vst [vmem:[#allocation3 + $0x8] sm:$0xff] 0.0
    %199 = vst [vmem:[#allocation3 + $0x10] sm:$0xff] 0.0
    %200 = vst [vmem:[#allocation3 + $0x18] sm:$0xff] 0.0
    %201 = vst [vmem:[#allocation3 + $0x20] sm:$0xff] 0.0
    %202 = vst [vmem:[#allocation3 + $0x28] sm:$0xff] 0.0
    %203 = vst [vmem:[#allocation3 + $0x30] sm:$0xff] 0.0
    %204 = vst [vmem:[#allocation3 + $0x38] sm:$0xff] 0.0
    %s205 = sld [smem:[#allocation4]]
    %s206 = scalar_lea.vmem [#allocation2], %s205
    %v207 = vld [vmem:[%s206] sm:$0x1]
    %208 = vst [vmem:[#allocation3] sm:$0x1] %v207
    %s209 = sld [smem:[#allocation4 + $0x80]]
    %s210 = scalar_lea.vmem [#allocation2], %s209
    %v211 = vld [vmem:[%s210] sm:$0x1]
    %212 = vst [vmem:[#allocation3 + $0x1] sm:$0x1] %v211
    %s213 = sld [smem:[#allocation4 + $0x1]]
    %s214 = scalar_lea.vmem [#allocation2], %s213
    %v215 = vld [vmem:[%s214] sm:$0x1]
    %s216 = scalar_lea.vmem [#allocation3], 8
    %217 = vst [vmem:[%s216] sm:$0x1] %v215
    %s218 = sld [smem:[#allocation4 + $0x81]]
    %s219 = scalar_lea.vmem [#allocation2], %s218
    %v220 = vld [vmem:[%s219] sm:$0x1]
    %221 = vst [vmem:[%s216 + $0x1] sm:$0x1] %v220
    %s222 = sld [smem:[#allocation4 + $0x2]]
    %s223 = scalar_lea.vmem [#allocation2], %s222
    %v224 = vld [vmem:[%s223] sm:$0x1]
    %s225 = scalar_lea.vmem [#allocation3], 16
    %226 = vst [vmem:[%s225] sm:$0x1] %v224
    %s227 = sld [smem:[#allocation4 + $0x82]]
    %s228 = scalar_lea.vmem [#allocation2], %s227
    %v229 = vld [vmem:[%s228] sm:$0x1]
    %230 = vst [vmem:[%s225 + $0x1] sm:$0x1] %v229
    %s231 = sld [smem:[#allocation4 + $0x3]]
    %s232 = scalar_lea.vmem [#allocation2], %s231
    %v233 = vld [vmem:[%s232] sm:$0x1]
    %s234 = scalar_lea.vmem [#allocation3], 24
    %235 = vst [vmem:[%s234] sm:$0x1] %v233
    %s236 = sld [smem:[#allocation4 + $0x83]]
    %s237 = scalar_lea.vmem [#allocation2], %s236
    %v238 = vld [vmem:[%s237] sm:$0x1]
    %239 = vst [vmem:[%s234 + $0x1] sm:$0x1] %v238
    %s240 = sld [smem:[#allocation4 + $0x4]]
    %s241 = scalar_lea.vmem [#allocation2], %s240
    %v242 = vld [vmem:[%s241] sm:$0x1]
    %s243 = scalar_lea.vmem [#allocation3], 32
    %244 = vst [vmem:[%s243] sm:$0x1] %v242
    %s245 = sld [smem:[#allocation4 + $0x84]]
    %s246 = scalar_lea.vmem [#allocation2], %s245
    %v247 = vld [vmem:[%s246] sm:$0x1]
    %248 = vst [vmem:[%s243 + $0x1] sm:$0x1] %v247
    %s249 = sld [smem:[#allocation4 + $0x5]]
    %s250 = scalar_lea.vmem [#allocation2], %s249
    %v251 = vld [vmem:[%s250] sm:$0x1]
    %s252 = scalar_lea.vmem [#allocation3], 40
    %253 = vst [vmem:[%s252] sm:$0x1] %v251
    %s254 = sld [smem:[#allocation4 + $0x85]]
    %s255 = scalar_lea.vmem [#allocation2], %s254
    %v256 = vld [vmem:[%s255] sm:$0x1]
    %257 = vst [vmem:[%s252 + $0x1] sm:$0x1] %v256
    %s258 = sld [smem:[#allocation4 + $0x6]]
    %s259 = scalar_lea.vmem [#allocation2], %s258
    %v260 = vld [vmem:[%s259] sm:$0x1]
    %s261 = scalar_lea.vmem [#allocation3], 48
    %262 = vst [vmem:[%s261] sm:$0x1] %v260
    %s263 = sld [smem:[#allocation4 + $0x86]]
    %s264 = scalar_lea.vmem [#allocation2], %s263
    %v265 = vld [vmem:[%s264] sm:$0x1]
    %266 = vst [vmem:[%s261 + $0x1] sm:$0x1] %v265
    %s267 = sld [smem:[#allocation4 + $0x7]]
    %s268 = scalar_lea.vmem [#allocation2], %s267
    %v269 = vld [vmem:[%s268] sm:$0x1]
    %s270 = scalar_lea.vmem [#allocation3], 56
    %271 = vst [vmem:[%s270] sm:$0x1] %v269
    %s272 = sld [smem:[#allocation4 + $0x87]]
    %s273 = scalar_lea.vmem [#allocation2], %s272
    %v274 = vld [vmem:[%s273] sm:$0x1]
    %275 = vst [vmem:[%s270 + $0x1] sm:$0x1] %v274
    %v276 = vld [vmem:[#allocation11] sm:$0xff]
    %v277 = vld [vmem:[#allocation11 + $0x8] sm:$0xff]
    %v278 = vld [vmem:[#allocation11 + $0x10] sm:$0xff]
    %v279 = vld [vmem:[#allocation11 + $0x18] sm:$0xff]
    %v280 = vld [vmem:[#allocation11 + $0x20] sm:$0xff]
    %v281 = vld [vmem:[#allocation11 + $0x28] sm:$0xff]
    %v282 = vld [vmem:[#allocation11 + $0x30] sm:$0xff]
    %v283 = vld [vmem:[#allocation11 + $0x38] sm:$0xff]
    %v284 = vld [vmem:[#allocation11 + $0x40] sm:$0xff]
    %v285 = vld [vmem:[#allocation11 + $0x48] sm:$0xff]
    %v286 = vld [vmem:[#allocation11 + $0x50] sm:$0xff]
    %v287 = vld [vmem:[#allocation11 + $0x58] sm:$0xff]
    %v288 = vld [vmem:[#allocation11 + $0x60] sm:$0xff]
    %v289 = vld [vmem:[#allocation11 + $0x68] sm:$0xff]
    %v290 = vld [vmem:[#allocation11 + $0x70] sm:$0xff]
    %v291 = vld [vmem:[#allocation11 + $0x78] sm:$0xff]
    %v292 = vld [vmem:[#allocation11 + $0x80] sm:$0xff]
    %v293 = vld [vmem:[#allocation11 + $0x88] sm:$0xff]
    %v294 = vld [vmem:[#allocation11 + $0x90] sm:$0xff]
    %v295 = vld [vmem:[#allocation11 + $0x98] sm:$0xff]
    %v296 = vld [vmem:[#allocation11 + $0xa0] sm:$0xff]
    %v297 = vld [vmem:[#allocation11 + $0xa8] sm:$0xff]
    %v298 = vld [vmem:[#allocation11 + $0xb0] sm:$0xff]
    %v299 = vld [vmem:[#allocation11 + $0xb8] sm:$0xff]
    %v300 = vld [vmem:[#allocation11 + $0xc0] sm:$0xff]
    %v301 = vld [vmem:[#allocation11 + $0xc8] sm:$0xff]
    %v302 = vld [vmem:[#allocation11 + $0xd0] sm:$0xff]
    %v303 = vld [vmem:[#allocation11 + $0xd8] sm:$0xff]
    %v304 = vld [vmem:[#allocation11 + $0xe0] sm:$0xff]
    %v305 = vld [vmem:[#allocation11 + $0xe8] sm:$0xff]
    %v306 = vld [vmem:[#allocation11 + $0xf0] sm:$0xff]
    %v307 = vld [vmem:[#allocation11 + $0xf8] sm:$0xff]
    %v308 = vld [vmem:[#allocation11 + $0x100] sm:$0xff]
    %v309 = vld [vmem:[#allocation11 + $0x108] sm:$0xff]
    %v310 = vld [vmem:[#allocation11 + $0x110] sm:$0xff]
    %v311 = vld [vmem:[#allocation11 + $0x118] sm:$0xff]
    %v312 = vld [vmem:[#allocation11 + $0x120] sm:$0xff]
    %v313 = vld [vmem:[#allocation11 + $0x128] sm:$0xff]
    %v314 = vld [vmem:[#allocation11 + $0x130] sm:$0xff]
    %v315 = vld [vmem:[#allocation11 + $0x138] sm:$0xff]
    %v316 = vld [vmem:[#allocation11 + $0x140] sm:$0xff]
    %v317 = vld [vmem:[#allocation11 + $0x148] sm:$0xff]
    %v318 = vld [vmem:[#allocation11 + $0x150] sm:$0xff]
    %v319 = vld [vmem:[#allocation11 + $0x158] sm:$0xff]
    %v320 = vld [vmem:[#allocation11 + $0x160] sm:$0xff]
    %v321 = vld [vmem:[#allocation11 + $0x168] sm:$0xff]
    %v322 = vld [vmem:[#allocation11 + $0x170] sm:$0xff]
    %v323 = vld [vmem:[#allocation11 + $0x178] sm:$0xff]
    %v324 = vld [vmem:[#allocation11 + $0x180] sm:$0xff]
    %v325 = vld [vmem:[#allocation11 + $0x188] sm:$0xff]
    %v326 = vld [vmem:[#allocation11 + $0x190] sm:$0xff]
    %v327 = vld [vmem:[#allocation11 + $0x198] sm:$0xff]
    %v328 = vld [vmem:[#allocation11 + $0x1a0] sm:$0xff]
    %v329 = vld [vmem:[#allocation11 + $0x1a8] sm:$0xff]
    %v330 = vld [vmem:[#allocation11 + $0x1b0] sm:$0xff]
    %v331 = vld [vmem:[#allocation11 + $0x1b8] sm:$0xff]
    %v332 = vld [vmem:[#allocation11 + $0x1c0] sm:$0xff]
    %v333 = vld [vmem:[#allocation11 + $0x1c8] sm:$0xff]
    %v334 = vld [vmem:[#allocation11 + $0x1d0] sm:$0xff]
    %v335 = vld [vmem:[#allocation11 + $0x1d8] sm:$0xff]
    %v336 = vld [vmem:[#allocation11 + $0x1e0] sm:$0xff]
    %v337 = vld [vmem:[#allocation11 + $0x1e8] sm:$0xff]
    %v338 = vld [vmem:[#allocation11 + $0x1f0] sm:$0xff]
    %v339 = vld [vmem:[#allocation11 + $0x1f8] sm:$0xff]
    %v340 = vld [vmem:[%s4] sm:$0x3]
    %v342 = vlaneseq
    %v343 = vshrl.u32 %v342, 7
    %v344 = vsub.s32 0, %v343
    %v345 = vrot.slane %v340, %v344
    %v346 = vlaneseq
    %v347 = vshrl.u32 %v346, 7
    %v348 = vsub.s32 1, %v347
    %v349 = vrot.slane %v340, %v348
    %352 = vmatprep.subr.mxu0 %v277
    %353 = vmatpush1.msra.mxu0 %v276
    %354 = vmatprep.subr.mxu0 %v279
    %355 = vmatpush1.msra.mxu0 %v278
    %356 = vmatprep.subr.mxu0 %v281
    %357 = vmatpush1.msra.mxu0 %v280
    %358 = vmatprep.subr.mxu0 %v283
    %359 = vmatpush1.msra.mxu0 %v282
    %360 = vmatprep.subr.mxu0 %v285
    %361 = vmatpush1.msra.mxu0 %v284
    %362 = vmatprep.subr.mxu0 %v287
    %363 = vmatpush1.msra.mxu0 %v286
    %364 = vmatprep.subr.mxu0 %v289
    %365 = vmatpush1.msra.mxu0 %v288
    %366 = vmatprep.subr.mxu0 %v291
    %367 = vmatpush1.msra.mxu0 %v290
    %368 = vmatprep.subr.mxu0 %v293
    %369 = vmatpush1.msra.mxu0 %v292
    %370 = vmatprep.subr.mxu0 %v295
    %371 = vmatpush1.msra.mxu0 %v294
    %372 = vmatprep.subr.mxu0 %v297
    %373 = vmatpush1.msra.mxu0 %v296
    %374 = vmatprep.subr.mxu0 %v299
    %375 = vmatpush1.msra.mxu0 %v298
    %376 = vmatprep.subr.mxu0 %v301
    %377 = vmatpush1.msra.mxu0 %v300
    %378 = vmatprep.subr.mxu0 %v303
    %379 = vmatpush1.msra.mxu0 %v302
    %380 = vmatprep.subr.mxu0 %v305
    %381 = vmatpush1.msra.mxu0 %v304
    %382 = vmatprep.subr.mxu0 %v307
    %383 = vmatpush1.msra.mxu0 %v306
    %384 = vmatprep.subr.mxu0 %v309
    %385 = vmatpush1.msra.mxu0 %v308
    %386 = vmatprep.subr.mxu0 %v311
    %387 = vmatpush1.msra.mxu0 %v310
    %388 = vmatprep.subr.mxu0 %v313
    %389 = vmatpush1.msra.mxu0 %v312
    %390 = vmatprep.subr.mxu0 %v315
    %391 = vmatpush1.msra.mxu0 %v314
    %392 = vmatprep.subr.mxu0 %v317
    %393 = vmatpush1.msra.mxu0 %v316
    %394 = vmatprep.subr.mxu0 %v319
    %395 = vmatpush1.msra.mxu0 %v318
    %396 = vmatprep.subr.mxu0 %v321
    %397 = vmatpush1.msra.mxu0 %v320
    %398 = vmatprep.subr.mxu0 %v323
    %399 = vmatpush1.msra.mxu0 %v322
    %400 = vmatprep.subr.mxu0 %v325
    %401 = vmatpush1.msra.mxu0 %v324
    %402 = vmatprep.subr.mxu0 %v327
    %403 = vmatpush1.msra.mxu0 %v326
    %404 = vmatprep.subr.mxu0 %v329
    %405 = vmatpush1.msra.mxu0 %v328
    %406 = vmatprep.subr.mxu0 %v331
    %407 = vmatpush1.msra.mxu0 %v330
    %408 = vmatprep.subr.mxu0 %v333
    %409 = vmatpush1.msra.mxu0 %v332
    %410 = vmatprep.subr.mxu0 %v335
    %411 = vmatpush1.msra.mxu0 %v334
    %412 = vmatprep.subr.mxu0 %v337
    %413 = vmatpush1.msra.mxu0 %v336
    %414 = vmatprep.subr.mxu0 %v339
    %415 = vmatpush1.msra.mxu0 %v338
    %416 = vmatprep.mubr.f32.mxu0 0.0
    %417 = vmatmul.mubr.f32.gmra.mrb[0].mxu0 0.0
    %v418 = vpop.f32.mrb[0].mxu0
    %v419 = vadd.f32 %v345, %v418
    %v420 = vpop.f32.mrb[0].mxu0
    %421 = vdwg.mxu0
    %v422 = vld [vmem:[#allocation3] sm:$0xff]
    %v423 = vadd.f32 %v419, %v422
    %v424 = vtanh.pop %v423
    %425 = vmatprep.subr.mxu0 %v277
    %426 = vmatpush1.msra.mxu0 %v276
    %427 = vmatprep.subr.mxu0 %v279
    %428 = vmatpush1.msra.mxu0 %v278
    %429 = vmatprep.subr.mxu0 %v281
    %430 = vmatpush1.msra.mxu0 %v280
    %431 = vmatprep.subr.mxu0 %v283
    %432 = vmatpush1.msra.mxu0 %v282
    %433 = vmatprep.subr.mxu0 %v285
    %434 = vmatpush1.msra.mxu0 %v284
    %435 = vmatprep.subr.mxu0 %v287
    %436 = vmatpush1.msra.mxu0 %v286
    %437 = vmatprep.subr.mxu0 %v289
    %438 = vmatpush1.msra.mxu0 %v288
    %439 = vmatprep.subr.mxu0 %v291
    %440 = vmatpush1.msra.mxu0 %v290
    %441 = vmatprep.subr.mxu0 %v293
    %442 = vmatpush1.msra.mxu0 %v292
    %443 = vmatprep.subr.mxu0 %v295
    %444 = vmatpush1.msra.mxu0 %v294
    %445 = vmatprep.subr.mxu0 %v297
    %446 = vmatpush1.msra.mxu0 %v296
    %447 = vmatprep.subr.mxu0 %v299
    %448 = vmatpush1.msra.mxu0 %v298
    %449 = vmatprep.subr.mxu0 %v301
    %450 = vmatpush1.msra.mxu0 %v300
    %451 = vmatprep.subr.mxu0 %v303
    %452 = vmatpush1.msra.mxu0 %v302
    %453 = vmatprep.subr.mxu0 %v305
    %454 = vmatpush1.msra.mxu0 %v304
    %455 = vmatprep.subr.mxu0 %v307
    %456 = vmatpush1.msra.mxu0 %v306
    %457 = vmatprep.subr.mxu0 %v309
    %458 = vmatpush1.msra.mxu0 %v308
    %459 = vmatprep.subr.mxu0 %v311
    %460 = vmatpush1.msra.mxu0 %v310
    %461 = vmatprep.subr.mxu0 %v313
    %462 = vmatpush1.msra.mxu0 %v312
    %463 = vmatprep.subr.mxu0 %v315
    %464 = vmatpush1.msra.mxu0 %v314
    %465 = vmatprep.subr.mxu0 %v317
    %466 = vmatpush1.msra.mxu0 %v316
    %467 = vmatprep.subr.mxu0 %v319
    %468 = vmatpush1.msra.mxu0 %v318
    %469 = vmatprep.subr.mxu0 %v321
    %470 = vmatpush1.msra.mxu0 %v320
    %471 = vmatprep.subr.mxu0 %v323
    %472 = vmatpush1.msra.mxu0 %v322
    %473 = vmatprep.subr.mxu0 %v325
    %474 = vmatpush1.msra.mxu0 %v324
    %475 = vmatprep.subr.mxu0 %v327
    %476 = vmatpush1.msra.mxu0 %v326
    %477 = vmatprep.subr.mxu0 %v329
    %478 = vmatpush1.msra.mxu0 %v328
    %479 = vmatprep.subr.mxu0 %v331
    %480 = vmatpush1.msra.mxu0 %v330
    %481 = vmatprep.subr.mxu0 %v333
    %482 = vmatpush1.msra.mxu0 %v332
    %483 = vmatprep.subr.mxu0 %v335
    %484 = vmatpush1.msra.mxu0 %v334
    %485 = vmatprep.subr.mxu0 %v337
    %486 = vmatpush1.msra.mxu0 %v336
    %487 = vmatprep.subr.mxu0 %v339
    %488 = vmatpush1.msra.mxu0 %v338
    %489 = vmatprep.mubr.f32.mxu0 0.0
    %490 = vmatmul.mubr.f32.gmra.mrb[0].mxu0 %v424
    %v491 = vpop.f32.mrb[0].mxu0
    %v492 = vadd.f32 %v345, %v491
    %v493 = vpop.f32.mrb[0].mxu0
    %v494 = vadd.f32 %v349, %v493
    %495 = vdwg.mxu0
    %v496 = vld [vmem:[%s216] sm:$0xff]
    %v497 = vadd.f32 %v492, %v496
    %v498 = vtanh.pop %v497
    %v499 = vtanh.pop %v494
    %500 = vmatprep.subr.mxu0 %v277
    %501 = vmatpush1.msra.mxu0 %v276
    %502 = vmatprep.subr.mxu0 %v279
    %503 = vmatpush1.msra.mxu0 %v278
    %504 = vmatprep.subr.mxu0 %v281
    %505 = vmatpush1.msra.mxu0 %v280
    %506 = vmatprep.subr.mxu0 %v283
    %507 = vmatpush1.msra.mxu0 %v282
    %508 = vmatprep.subr.mxu0 %v285
    %509 = vmatpush1.msra.mxu0 %v284
    %510 = vmatprep.subr.mxu0 %v287
    %511 = vmatpush1.msra.mxu0 %v286
    %512 = vmatprep.subr.mxu0 %v289
    %513 = vmatpush1.msra.mxu0 %v288
    %514 = vmatprep.subr.mxu0 %v291
    %515 = vmatpush1.msra.mxu0 %v290
    %516 = vmatprep.subr.mxu0 %v293
    %517 = vmatpush1.msra.mxu0 %v292
    %518 = vmatprep.subr.mxu0 %v295
    %519 = vmatpush1.msra.mxu0 %v294
    %520 = vmatprep.subr.mxu0 %v297
    %521 = vmatpush1.msra.mxu0 %v296
    %522 = vmatprep.subr.mxu0 %v299
    %523 = vmatpush1.msra.mxu0 %v298
    %524 = vmatprep.subr.mxu0 %v301
    %525 = vmatpush1.msra.mxu0 %v300
    %526 = vmatprep.subr.mxu0 %v303
    %527 = vmatpush1.msra.mxu0 %v302
    %528 = vmatprep.subr.mxu0 %v305
    %529 = vmatpush1.msra.mxu0 %v304
    %530 = vmatprep.subr.mxu0 %v307
    %531 = vmatpush1.msra.mxu0 %v306
    %532 = vmatprep.subr.mxu0 %v309
    %533 = vmatpush1.msra.mxu0 %v308
    %534 = vmatprep.subr.mxu0 %v311
    %535 = vmatpush1.msra.mxu0 %v310
    %536 = vmatprep.subr.mxu0 %v313
    %537 = vmatpush1.msra.mxu0 %v312
    %538 = vmatprep.subr.mxu0 %v315
    %539 = vmatpush1.msra.mxu0 %v314
    %540 = vmatprep.subr.mxu0 %v317
    %541 = vmatpush1.msra.mxu0 %v316
    %542 = vmatprep.subr.mxu0 %v319
    %543 = vmatpush1.msra.mxu0 %v318
    %544 = vmatprep.subr.mxu0 %v321
    %545 = vmatpush1.msra.mxu0 %v320
    %546 = vmatprep.subr.mxu0 %v323
    %547 = vmatpush1.msra.mxu0 %v322
    %548 = vmatprep.subr.mxu0 %v325
    %549 = vmatpush1.msra.mxu0 %v324
    %550 = vmatprep.subr.mxu0 %v327
    %551 = vmatpush1.msra.mxu0 %v326
    %552 = vmatprep.subr.mxu0 %v329
    %553 = vmatpush1.msra.mxu0 %v328
    %554 = vmatprep.subr.mxu0 %v331
    %555 = vmatpush1.msra.mxu0 %v330
    %556 = vmatprep.subr.mxu0 %v333
    %557 = vmatpush1.msra.mxu0 %v332
    %558 = vmatprep.subr.mxu0 %v335
    %559 = vmatpush1.msra.mxu0 %v334
    %560 = vmatprep.subr.mxu0 %v337
    %561 = vmatpush1.msra.mxu0 %v336
    %562 = vmatprep.subr.mxu0 %v339
    %563 = vmatpush1.msra.mxu0 %v338
    %564 = vmatprep.mubr.f32.mxu0 %v499
    %565 = vmatmul.mubr.f32.gmra.mrb[0].mxu0 %v498
    %v566 = vpop.f32.mrb[0].mxu0
    %v567 = vadd.f32 %v345, %v566
    %v568 = vpop.f32.mrb[0].mxu0
    %v569 = vadd.f32 %v349, %v568
    %570 = vdwg.mxu0
    %v571 = vld [vmem:[%s225] sm:$0xff]
    %v572 = vadd.f32 %v567, %v571
    %v573 = vtanh.pop %v572
    %v574 = vtanh.pop %v569
    %575 = vmatprep.subr.mxu0 %v277
    %576 = vmatpush1.msra.mxu0 %v276
    %577 = vmatprep.subr.mxu0 %v279
    %578 = vmatpush1.msra.mxu0 %v278
    %579 = vmatprep.subr.mxu0 %v281
    %580 = vmatpush1.msra.mxu0 %v280
    %581 = vmatprep.subr.mxu0 %v283
    %582 = vmatpush1.msra.mxu0 %v282
    %583 = vmatprep.subr.mxu0 %v285
    %584 = vmatpush1.msra.mxu0 %v284
    %585 = vmatprep.subr.mxu0 %v287
    %586 = vmatpush1.msra.mxu0 %v286
    %587 = vmatprep.subr.mxu0 %v289
    %588 = vmatpush1.msra.mxu0 %v288
    %589 = vmatprep.subr.mxu0 %v291
    %590 = vmatpush1.msra.mxu0 %v290
    %591 = vmatprep.subr.mxu0 %v293
    %592 = vmatpush1.msra.mxu0 %v292
    %593 = vmatprep.subr.mxu0 %v295
    %594 = vmatpush1.msra.mxu0 %v294
    %595 = vmatprep.subr.mxu0 %v297
    %596 = vmatpush1.msra.mxu0 %v296
    %597 = vmatprep.subr.mxu0 %v299
    %598 = vmatpush1.msra.mxu0 %v298
    %599 = vmatprep.subr.mxu0 %v301
    %600 = vmatpush1.msra.mxu0 %v300
    %601 = vmatprep.subr.mxu0 %v303
    %602 = vmatpush1.msra.mxu0 %v302
    %603 = vmatprep.subr.mxu0 %v305
    %604 = vmatpush1.msra.mxu0 %v304
    %605 = vmatprep.subr.mxu0 %v307
    %606 = vmatpush1.msra.mxu0 %v306
    %607 = vmatprep.subr.mxu0 %v309
    %608 = vmatpush1.msra.mxu0 %v308
    %609 = vmatprep.subr.mxu0 %v311
    %610 = vmatpush1.msra.mxu0 %v310
    %611 = vmatprep.subr.mxu0 %v313
    %612 = vmatpush1.msra.mxu0 %v312
    %613 = vmatprep.subr.mxu0 %v315
    %614 = vmatpush1.msra.mxu0 %v314
    %615 = vmatprep.subr.mxu0 %v317
    %616 = vmatpush1.msra.mxu0 %v316
    %617 = vmatprep.subr.mxu0 %v319
    %618 = vmatpush1.msra.mxu0 %v318
    %619 = vmatprep.subr.mxu0 %v321
    %620 = vmatpush1.msra.mxu0 %v320
    %621 = vmatprep.subr.mxu0 %v323
    %622 = vmatpush1.msra.mxu0 %v322
    %623 = vmatprep.subr.mxu0 %v325
    %624 = vmatpush1.msra.mxu0 %v324
    %625 = vmatprep.subr.mxu0 %v327
    %626 = vmatpush1.msra.mxu0 %v326
    %627 = vmatprep.subr.mxu0 %v329
    %628 = vmatpush1.msra.mxu0 %v328
    %629 = vmatprep.subr.mxu0 %v331
    %630 = vmatpush1.msra.mxu0 %v330
    %631 = vmatprep.subr.mxu0 %v333
    %632 = vmatpush1.msra.mxu0 %v332
    %633 = vmatprep.subr.mxu0 %v335
    %634 = vmatpush1.msra.mxu0 %v334
    %635 = vmatprep.subr.mxu0 %v337
    %636 = vmatpush1.msra.mxu0 %v336
    %637 = vmatprep.subr.mxu0 %v339
    %638 = vmatpush1.msra.mxu0 %v338
    %639 = vmatprep.mubr.f32.mxu0 %v574
    %640 = vmatmul.mubr.f32.gmra.mrb[0].mxu0 %v573
    %v641 = vpop.f32.mrb[0].mxu0
    %v642 = vadd.f32 %v345, %v641
    %v643 = vpop.f32.mrb[0].mxu0
    %v644 = vadd.f32 %v349, %v643
    %645 = vdwg.mxu0
    %v646 = vld [vmem:[%s234] sm:$0xff]
    %v647 = vadd.f32 %v642, %v646
    %v648 = vtanh.pop %v647
    %v649 = vtanh.pop %v644
    %650 = vmatprep.subr.mxu0 %v277
    %651 = vmatpush1.msra.mxu0 %v276
    %652 = vmatprep.subr.mxu0 %v279
    %653 = vmatpush1.msra.mxu0 %v278
    %654 = vmatprep.subr.mxu0 %v281
    %655 = vmatpush1.msra.mxu0 %v280
    %656 = vmatprep.subr.mxu0 %v283
    %657 = vmatpush1.msra.mxu0 %v282
    %658 = vmatprep.subr.mxu0 %v285
    %659 = vmatpush1.msra.mxu0 %v284
    %660 = vmatprep.subr.mxu0 %v287
    %661 = vmatpush1.msra.mxu0 %v286
    %662 = vmatprep.subr.mxu0 %v289
    %663 = vmatpush1.msra.mxu0 %v288
    %664 = vmatprep.subr.mxu0 %v291
    %665 = vmatpush1.msra.mxu0 %v290
    %666 = vmatprep.subr.mxu0 %v293
    %667 = vmatpush1.msra.mxu0 %v292
    %668 = vmatprep.subr.mxu0 %v295
    %669 = vmatpush1.msra.mxu0 %v294
    %670 = vmatprep.subr.mxu0 %v297
    %671 = vmatpush1.msra.mxu0 %v296
    %672 = vmatprep.subr.mxu0 %v299
    %673 = vmatpush1.msra.mxu0 %v298
    %674 = vmatprep.subr.mxu0 %v301
    %675 = vmatpush1.msra.mxu0 %v300
    %676 = vmatprep.subr.mxu0 %v303
    %677 = vmatpush1.msra.mxu0 %v302
    %678 = vmatprep.subr.mxu0 %v305
    %679 = vmatpush1.msra.mxu0 %v304
    %680 = vmatprep.subr.mxu0 %v307
    %681 = vmatpush1.msra.mxu0 %v306
    %682 = vmatprep.subr.mxu0 %v309
    %683 = vmatpush1.msra.mxu0 %v308
    %684 = vmatprep.subr.mxu0 %v311
    %685 = vmatpush1.msra.mxu0 %v310
    %686 = vmatprep.subr.mxu0 %v313
    %687 = vmatpush1.msra.mxu0 %v312
    %688 = vmatprep.subr.mxu0 %v315
    %689 = vmatpush1.msra.mxu0 %v314
    %690 = vmatprep.subr.mxu0 %v317
    %691 = vmatpush1.msra.mxu0 %v316
    %692 = vmatprep.subr.mxu0 %v319
    %693 = vmatpush1.msra.mxu0 %v318
    %694 = vmatprep.subr.mxu0 %v321
    %695 = vmatpush1.msra.mxu0 %v320
    %696 = vmatprep.subr.mxu0 %v323
    %697 = vmatpush1.msra.mxu0 %v322
    %698 = vmatprep.subr.mxu0 %v325
    %699 = vmatpush1.msra.mxu0 %v324
    %700 = vmatprep.subr.mxu0 %v327
    %701 = vmatpush1.msra.mxu0 %v326
    %702 = vmatprep.subr.mxu0 %v329
    %703 = vmatpush1.msra.mxu0 %v328
    %704 = vmatprep.subr.mxu0 %v331
    %705 = vmatpush1.msra.mxu0 %v330
    %706 = vmatprep.subr.mxu0 %v333
    %707 = vmatpush1.msra.mxu0 %v332
    %708 = vmatprep.subr.mxu0 %v335
    %709 = vmatpush1.msra.mxu0 %v334
    %710 = vmatprep.subr.mxu0 %v337
    %711 = vmatpush1.msra.mxu0 %v336
    %712 = vmatprep.subr.mxu0 %v339
    %713 = vmatpush1.msra.mxu0 %v338
    %714 = vmatprep.mubr.f32.mxu0 %v649
    %715 = vmatmul.mubr.f32.gmra.mrb[0].mxu0 %v648
    %v716 = vpop.f32.mrb[0].mxu0
    %v717 = vadd.f32 %v345, %v716
    %v718 = vpop.f32.mrb[0].mxu0
    %v719 = vadd.f32 %v349, %v718
    %720 = vdwg.mxu0
    %v721 = vld [vmem:[%s243] sm:$0xff]
    %v722 = vadd.f32 %v717, %v721
    %v723 = vtanh.pop %v722
    %v724 = vtanh.pop %v719
    %725 = vmatprep.subr.mxu0 %v277
    %726 = vmatpush1.msra.mxu0 %v276
    %727 = vmatprep.subr.mxu0 %v279
    %728 = vmatpush1.msra.mxu0 %v278
    %729 = vmatprep.subr.mxu0 %v281
    %730 = vmatpush1.msra.mxu0 %v280
    %731 = vmatprep.subr.mxu0 %v283
    %732 = vmatpush1.msra.mxu0 %v282
    %733 = vmatprep.subr.mxu0 %v285
    %734 = vmatpush1.msra.mxu0 %v284
    %735 = vmatprep.subr.mxu0 %v287
    %736 = vmatpush1.msra.mxu0 %v286
    %737 = vmatprep.subr.mxu0 %v289
    %738 = vmatpush1.msra.mxu0 %v288
    %739 = vmatprep.subr.mxu0 %v291
    %740 = vmatpush1.msra.mxu0 %v290
    %741 = vmatprep.subr.mxu0 %v293
    %742 = vmatpush1.msra.mxu0 %v292
    %743 = vmatprep.subr.mxu0 %v295
    %744 = vmatpush1.msra.mxu0 %v294
    %745 = vmatprep.subr.mxu0 %v297
    %746 = vmatpush1.msra.mxu0 %v296
    %747 = vmatprep.subr.mxu0 %v299
    %748 = vmatpush1.msra.mxu0 %v298
    %749 = vmatprep.subr.mxu0 %v301
    %750 = vmatpush1.msra.mxu0 %v300
    %751 = vmatprep.subr.mxu0 %v303
    %752 = vmatpush1.msra.mxu0 %v302
    %753 = vmatprep.subr.mxu0 %v305
    %754 = vmatpush1.msra.mxu0 %v304
    %755 = vmatprep.subr.mxu0 %v307
    %756 = vmatpush1.msra.mxu0 %v306
    %757 = vmatprep.subr.mxu0 %v309
    %758 = vmatpush1.msra.mxu0 %v308
    %759 = vmatprep.subr.mxu0 %v311
    %760 = vmatpush1.msra.mxu0 %v310
    %761 = vmatprep.subr.mxu0 %v313
    %762 = vmatpush1.msra.mxu0 %v312
    %763 = vmatprep.subr.mxu0 %v315
    %764 = vmatpush1.msra.mxu0 %v314
    %765 = vmatprep.subr.mxu0 %v317
    %766 = vmatpush1.msra.mxu0 %v316
    %767 = vmatprep.subr.mxu0 %v319
    %768 = vmatpush1.msra.mxu0 %v318
    %769 = vmatprep.subr.mxu0 %v321
    %770 = vmatpush1.msra.mxu0 %v320
    %771 = vmatprep.subr.mxu0 %v323
    %772 = vmatpush1.msra.mxu0 %v322
    %773 = vmatprep.subr.mxu0 %v325
    %774 = vmatpush1.msra.mxu0 %v324
    %775 = vmatprep.subr.mxu0 %v327
    %776 = vmatpush1.msra.mxu0 %v326
    %777 = vmatprep.subr.mxu0 %v329
    %778 = vmatpush1.msra.mxu0 %v328
    %779 = vmatprep.subr.mxu0 %v331
    %780 = vmatpush1.msra.mxu0 %v330
    %781 = vmatprep.subr.mxu0 %v333
    %782 = vmatpush1.msra.mxu0 %v332
    %783 = vmatprep.subr.mxu0 %v335
    %784 = vmatpush1.msra.mxu0 %v334
    %785 = vmatprep.subr.mxu0 %v337
    %786 = vmatpush1.msra.mxu0 %v336
    %787 = vmatprep.subr.mxu0 %v339
    %788 = vmatpush1.msra.mxu0 %v338
    %789 = vmatprep.mubr.f32.mxu0 %v724
    %790 = vmatmul.mubr.f32.gmra.mrb[0].mxu0 %v723
    %v791 = vpop.f32.mrb[0].mxu0
    %v792 = vadd.f32 %v345, %v791
    %v793 = vpop.f32.mrb[0].mxu0
    %v794 = vadd.f32 %v349, %v793
    %795 = vdwg.mxu0
    %v796 = vld [vmem:[%s252] sm:$0xff]
    %v797 = vadd.f32 %v792, %v796
    %v798 = vtanh.pop %v797
    %v799 = vtanh.pop %v794
    %800 = vmatprep.subr.mxu0 %v277
    %801 = vmatpush1.msra.mxu0 %v276
    %802 = vmatprep.subr.mxu0 %v279
    %803 = vmatpush1.msra.mxu0 %v278
    %804 = vmatprep.subr.mxu0 %v281
    %805 = vmatpush1.msra.mxu0 %v280
    %806 = vmatprep.subr.mxu0 %v283
    %807 = vmatpush1.msra.mxu0 %v282
    %808 = vmatprep.subr.mxu0 %v285
    %809 = vmatpush1.msra.mxu0 %v284
    %810 = vmatprep.subr.mxu0 %v287
    %811 = vmatpush1.msra.mxu0 %v286
    %812 = vmatprep.subr.mxu0 %v289
    %813 = vmatpush1.msra.mxu0 %v288
    %814 = vmatprep.subr.mxu0 %v291
    %815 = vmatpush1.msra.mxu0 %v290
    %816 = vmatprep.subr.mxu0 %v293
    %817 = vmatpush1.msra.mxu0 %v292
    %818 = vmatprep.subr.mxu0 %v295
    %819 = vmatpush1.msra.mxu0 %v294
    %820 = vmatprep.subr.mxu0 %v297
    %821 = vmatpush1.msra.mxu0 %v296
    %822 = vmatprep.subr.mxu0 %v299
    %823 = vmatpush1.msra.mxu0 %v298
    %824 = vmatprep.subr.mxu0 %v301
    %825 = vmatpush1.msra.mxu0 %v300
    %826 = vmatprep.subr.mxu0 %v303
    %827 = vmatpush1.msra.mxu0 %v302
    %828 = vmatprep.subr.mxu0 %v305
    %829 = vmatpush1.msra.mxu0 %v304
    %830 = vmatprep.subr.mxu0 %v307
    %831 = vmatpush1.msra.mxu0 %v306
    %832 = vmatprep.subr.mxu0 %v309
    %833 = vmatpush1.msra.mxu0 %v308
    %834 = vmatprep.subr.mxu0 %v311
    %835 = vmatpush1.msra.mxu0 %v310
    %836 = vmatprep.subr.mxu0 %v313
    %837 = vmatpush1.msra.mxu0 %v312
    %838 = vmatprep.subr.mxu0 %v315
    %839 = vmatpush1.msra.mxu0 %v314
    %840 = vmatprep.subr.mxu0 %v317
    %841 = vmatpush1.msra.mxu0 %v316
    %842 = vmatprep.subr.mxu0 %v319
    %843 = vmatpush1.msra.mxu0 %v318
    %844 = vmatprep.subr.mxu0 %v321
    %845 = vmatpush1.msra.mxu0 %v320
    %846 = vmatprep.subr.mxu0 %v323
    %847 = vmatpush1.msra.mxu0 %v322
    %848 = vmatprep.subr.mxu0 %v325
    %849 = vmatpush1.msra.mxu0 %v324
    %850 = vmatprep.subr.mxu0 %v327
    %851 = vmatpush1.msra.mxu0 %v326
    %852 = vmatprep.subr.mxu0 %v329
    %853 = vmatpush1.msra.mxu0 %v328
    %854 = vmatprep.subr.mxu0 %v331
    %855 = vmatpush1.msra.mxu0 %v330
    %856 = vmatprep.subr.mxu0 %v333
    %857 = vmatpush1.msra.mxu0 %v332
    %858 = vmatprep.subr.mxu0 %v335
    %859 = vmatpush1.msra.mxu0 %v334
    %860 = vmatprep.subr.mxu0 %v337
    %861 = vmatpush1.msra.mxu0 %v336
    %862 = vmatprep.subr.mxu0 %v339
    %863 = vmatpush1.msra.mxu0 %v338
    %864 = vmatprep.mubr.f32.mxu0 %v799
    %865 = vmatmul.mubr.f32.gmra.mrb[0].mxu0 %v798
    %v866 = vpop.f32.mrb[0].mxu0
    %v867 = vadd.f32 %v345, %v866
    %v868 = vpop.f32.mrb[0].mxu0
    %v869 = vadd.f32 %v349, %v868
    %870 = vdwg.mxu0
    %v871 = vld [vmem:[%s261] sm:$0xff]
    %v872 = vadd.f32 %v867, %v871
    %v873 = vtanh.pop %v872
    %v874 = vtanh.pop %v869
    %875 = vmatprep.subr.mxu0 %v277
    %876 = vmatpush1.msra.mxu0 %v276
    %877 = vmatprep.subr.mxu0 %v279
    %878 = vmatpush1.msra.mxu0 %v278
    %879 = vmatprep.subr.mxu0 %v281
    %880 = vmatpush1.msra.mxu0 %v280
    %881 = vmatprep.subr.mxu0 %v283
    %882 = vmatpush1.msra.mxu0 %v282
    %883 = vmatprep.subr.mxu0 %v285
    %884 = vmatpush1.msra.mxu0 %v284
    %885 = vmatprep.subr.mxu0 %v287
    %886 = vmatpush1.msra.mxu0 %v286
    %887 = vmatprep.subr.mxu0 %v289
    %888 = vmatpush1.msra.mxu0 %v288
    %889 = vmatprep.subr.mxu0 %v291
    %890 = vmatpush1.msra.mxu0 %v290
    %891 = vmatprep.subr.mxu0 %v293
    %892 = vmatpush1.msra.mxu0 %v292
    %893 = vmatprep.subr.mxu0 %v295
    %894 = vmatpush1.msra.mxu0 %v294
    %895 = vmatprep.subr.mxu0 %v297
    %896 = vmatpush1.msra.mxu0 %v296
    %897 = vmatprep.subr.mxu0 %v299
    %898 = vmatpush1.msra.mxu0 %v298
    %899 = vmatprep.subr.mxu0 %v301
    %900 = vmatpush1.msra.mxu0 %v300
    %901 = vmatprep.subr.mxu0 %v303
    %902 = vmatpush1.msra.mxu0 %v302
    %903 = vmatprep.subr.mxu0 %v305
    %904 = vmatpush1.msra.mxu0 %v304
    %905 = vmatprep.subr.mxu0 %v307
    %906 = vmatpush1.msra.mxu0 %v306
    %907 = vmatprep.subr.mxu0 %v309
    %908 = vmatpush1.msra.mxu0 %v308
    %909 = vmatprep.subr.mxu0 %v311
    %910 = vmatpush1.msra.mxu0 %v310
    %911 = vmatprep.subr.mxu0 %v313
    %912 = vmatpush1.msra.mxu0 %v312
    %913 = vmatprep.subr.mxu0 %v315
    %914 = vmatpush1.msra.mxu0 %v314
    %915 = vmatprep.subr.mxu0 %v317
    %916 = vmatpush1.msra.mxu0 %v316
    %917 = vmatprep.subr.mxu0 %v319
    %918 = vmatpush1.msra.mxu0 %v318
    %919 = vmatprep.subr.mxu0 %v321
    %920 = vmatpush1.msra.mxu0 %v320
    %921 = vmatprep.subr.mxu0 %v323
    %922 = vmatpush1.msra.mxu0 %v322
    %923 = vmatprep.subr.mxu0 %v325
    %924 = vmatpush1.msra.mxu0 %v324
    %925 = vmatprep.subr.mxu0 %v327
    %926 = vmatpush1.msra.mxu0 %v326
    %927 = vmatprep.subr.mxu0 %v329
    %928 = vmatpush1.msra.mxu0 %v328
    %929 = vmatprep.subr.mxu0 %v331
    %930 = vmatpush1.msra.mxu0 %v330
    %931 = vmatprep.subr.mxu0 %v333
    %932 = vmatpush1.msra.mxu0 %v332
    %933 = vmatprep.subr.mxu0 %v335
    %934 = vmatpush1.msra.mxu0 %v334
    %935 = vmatprep.subr.mxu0 %v337
    %936 = vmatpush1.msra.mxu0 %v336
    %937 = vmatprep.subr.mxu0 %v339
    %938 = vmatpush1.msra.mxu0 %v338
    %939 = vmatprep.mubr.f32.mxu0 %v874
    %940 = vmatmul.mubr.f32.gmra.mrb[0].mxu0 %v873
    %v941 = vpop.f32.mrb[0].mxu0
    %v942 = vadd.f32 %v345, %v941
    %v943 = vpop.f32.mrb[0].mxu0
    %v944 = vadd.f32 %v349, %v943
    %945 = vdwg.mxu0
    %v946 = vld [vmem:[%s270] sm:$0xff]
    %v947 = vadd.f32 %v942, %v946
    %v948 = vtanh.pop %v947
    %v949 = vtanh.pop %v944
    %950 = vmatprep.subr.mxu0 %v277
    %951 = vmatpush1.msra.mxu0 %v276
    %952 = vmatprep.subr.mxu0 %v279
    %953 = vmatpush1.msra.mxu0 %v278
    %954 = vmatprep.subr.mxu0 %v281
    %955 = vmatpush1.msra.mxu0 %v280
    %956 = vmatprep.subr.mxu0 %v283
    %957 = vmatpush1.msra.mxu0 %v282
    %958 = vmatprep.subr.mxu0 %v285
    %959 = vmatpush1.msra.mxu0 %v284
    %960 = vmatprep.subr.mxu0 %v287
    %961 = vmatpush1.msra.mxu0 %v286
    %962 = vmatprep.subr.mxu0 %v289
    %963 = vmatpush1.msra.mxu0 %v288
    %964 = vmatprep.subr.mxu0 %v291
    %965 = vmatpush1.msra.mxu0 %v290
    %966 = vmatprep.subr.mxu0 %v293
    %967 = vmatpush1.msra.mxu0 %v292
    %968 = vmatprep.subr.mxu0 %v295
    %969 = vmatpush1.msra.mxu0 %v294
    %970 = vmatprep.subr.mxu0 %v297
    %971 = vmatpush1.msra.mxu0 %v296
    %972 = vmatprep.subr.mxu0 %v299
    %973 = vmatpush1.msra.mxu0 %v298
    %974 = vmatprep.subr.mxu0 %v301
    %975 = vmatpush1.msra.mxu0 %v300
    %976 = vmatprep.subr.mxu0 %v303
    %977 = vmatpush1.msra.mxu0 %v302
    %978 = vmatprep.subr.mxu0 %v305
    %979 = vmatpush1.msra.mxu0 %v304
    %980 = vmatprep.subr.mxu0 %v307
    %981 = vmatpush1.msra.mxu0 %v306
    %982 = vmatprep.subr.mxu0 %v309
    %983 = vmatpush1.msra.mxu0 %v308
    %984 = vmatprep.subr.mxu0 %v311
    %985 = vmatpush1.msra.mxu0 %v310
    %986 = vmatprep.subr.mxu0 %v313
    %987 = vmatpush1.msra.mxu0 %v312
    %988 = vmatprep.subr.mxu0 %v315
    %989 = vmatpush1.msra.mxu0 %v314
    %990 = vmatprep.subr.mxu0 %v317
    %991 = vmatpush1.msra.mxu0 %v316
    %992 = vmatprep.subr.mxu0 %v319
    %993 = vmatpush1.msra.mxu0 %v318
    %994 = vmatprep.subr.mxu0 %v321
    %995 = vmatpush1.msra.mxu0 %v320
    %996 = vmatprep.subr.mxu0 %v323
    %997 = vmatpush1.msra.mxu0 %v322
    %998 = vmatprep.subr.mxu0 %v325
    %999 = vmatpush1.msra.mxu0 %v324
    %1000 = vmatprep.subr.mxu0 %v327
    %1001 = vmatpush1.msra.mxu0 %v326
    %1002 = vmatprep.subr.mxu0 %v329
    %1003 = vmatpush1.msra.mxu0 %v328
    %1004 = vmatprep.subr.mxu0 %v331
    %1005 = vmatpush1.msra.mxu0 %v330
    %1006 = vmatprep.subr.mxu0 %v333
    %1007 = vmatpush1.msra.mxu0 %v332
    %1008 = vmatprep.subr.mxu0 %v335
    %1009 = vmatpush1.msra.mxu0 %v334
    %1010 = vmatprep.subr.mxu0 %v337
    %1011 = vmatpush1.msra.mxu0 %v336
    %1012 = vmatprep.subr.mxu0 %v339
    %1013 = vmatpush1.msra.mxu0 %v338
    %1014 = vmatprep.mubr.f32.mxu0 %v949
    %1015 = vmatmul.mubr.f32.gmra.mrb[0].mxu0 %v948
    %v1016 = vpop.f32.mrb[0].mxu0
    %v1017 = vpop.f32.mrb[0].mxu0
    %v1018 = vadd.f32 %v349, %v1017
    %1019 = vdwg.mxu0
    %v1020 = vtanh.pop %v1018
    %1021 = vst [vmem:[#allocation12] sm:$0xff] %v948
    %s1022 = scalar_lea.vmem [#allocation12], 8
    %1023 = vst [vmem:[%s1022] sm:$0xff] %v1020
    // Predicated region
    $region38: #{tpu_custom_call.1} parent=1 // pred_check
      _
    $region39: #{tpu_custom_call.1} parent=1 // pred_check_branch
      %1025 = sbr.rel (0) target = $region41
    $region40: #{tpu_custom_call.1} parent=1 // pred_region
      %s1027 = ssub.s32 256, 256
      %1028 = vsyncadd [#allocation6], %s1027
      %s1029 = sshll.u32 [#allocation12], 4
      %s1030 = int_to_ptr.vmem [resolvable:$true] %s1029
      %1035 = dma.vmem_to_hbm [thread:$0]  %s1030, 256, %s5, [#allocation6], 128, 128, 8
    $region41: #{tpu_custom_call.1} parent=1 // pred_fallthru
      _
    // Predicated region
    $region42: #{tpu_custom_call.1} parent=1 // pred_check
      _
    $region43: #{tpu_custom_call.1} parent=1 // pred_check_branch
      %1037 = sbr.rel (0) target = $region45
    $region44: #{tpu_custom_call.1} parent=1 // pred_region
      %1038 = dma.done [#allocation6], 256
    $region45: #{tpu_custom_call.1} parent=1 // pred_fallthru
      _
    %1039 = vsyncpa [#allocation5], 1
    %1040 = vsyncpa [#allocation10], 1
    %1041 = vsyncpa [#allocation6], 1
    %1042 = vsyncpa [#allocation7], 1

</llo_original>
